<compile_context>
chip_gen: v6e
topology: v6e:2x2x1
jax: 0.10.0
libtpu: 0.0.40
codegen_flags: <defaults>
</compile_context>

<pallas_src>
import functools

import jax
import jax.numpy as jnp
from jax.experimental import pallas as pl
from jax.experimental.pallas import tpu as pltpu

IN_FEATURES = 20
H1 = 64
H2 = 32
OUT_FEATURES = 16

IN_PAD = 32     # layer-1 K padded to a multiple of the bf16 sublane pack (16)
OUT_PAD = 128   # output features padded to a full 128-lane vreg (unmasked stores)


def nest_mlp_kernel(x_ref, w1_ref, w2_ref, w3_ref, b_ref, o_ref):
    # x_ref: [TB, IN_PAD] bf16 ; w*_ref: bf16 ; b_ref: [3, OUT_PAD] f32 (packed biases)
    x = x_ref[...]

    b1 = b_ref[0:1, 0:H1]        # (1, 64)  f32
    b2 = b_ref[1:2, 0:H2]        # (1, 32)  f32
    b3 = b_ref[2:3, 0:OUT_PAD]   # (1, 128) f32 (cols 16.. are zero)

    # Layer 1: Linear(20 -> 64) + ReLU   (bf16 MXU matmul, f32 accumulate)
    h1 = jnp.dot(x, w1_ref[...], preferred_element_type=jnp.float32) + b1
    h1 = jnp.maximum(h1, 0.0)

    # Layer 2: Linear(64 -> 32) + ReLU
    h2 = jnp.dot(h1.astype(jnp.bfloat16), w2_ref[...],
                 preferred_element_type=jnp.float32) + b2
    h2 = jnp.maximum(h2, 0.0)

    # Output layer: Linear(32 -> 16), feature dim zero-padded to 128 so the
    # store to o_ref is a full-width lane-dense store.
    out = jnp.dot(h2.astype(jnp.bfloat16), w3_ref[...],
                  preferred_element_type=jnp.float32) + b3
    o_ref[...] = out.astype(o_ref.dtype)


@functools.partial(jax.jit, static_argnames=("block_b",))
def nest_mlp(x, params, *, block_b=512):
    """Fused NestMLP forward. x: [B, 20] float32 -> [B, 16] float32."""
    w1, b1, w2, b2, w3, b3 = params
    B = x.shape[0]

    # --- wrapper-side (XLA) layout prep: cheap, done once per call ----------
    # Pad batch to a multiple of the batch tile so every grid step is full.
    b_pad = pl.cdiv(B, block_b) * block_b
    x_p = jnp.zeros((b_pad, IN_PAD), jnp.bfloat16)
    x_p = x_p.at[:B, :IN_FEATURES].set(x.astype(jnp.bfloat16))

    # Weights -> bf16, zero-padded where needed (zero pads do not change math).
    w1_p = jnp.zeros((IN_PAD, H1), jnp.bfloat16)
    w1_p = w1_p.at[:IN_FEATURES, :].set(w1.astype(jnp.bfloat16))
    w2_p = w2.astype(jnp.bfloat16)
    w3_p = jnp.zeros((H2, OUT_PAD), jnp.bfloat16)
    w3_p = w3_p.at[:, :OUT_FEATURES].set(w3.astype(jnp.bfloat16))

    # Pack the three biases into a single lane-padded f32 operand.
    b_all = jnp.zeros((3, OUT_PAD), jnp.float32)
    b_all = b_all.at[0, :H1].set(b1.reshape(-1))
    b_all = b_all.at[1, :H2].set(b2.reshape(-1))
    b_all = b_all.at[2, :OUT_FEATURES].set(b3.reshape(-1))

    grid = (b_pad // block_b,)
    resident = lambda shape: pl.BlockSpec(shape, lambda i: (0,) * len(shape))

    out_pad = pl.pallas_call(
        nest_mlp_kernel,
        out_shape=jax.ShapeDtypeStruct((b_pad, OUT_PAD), jnp.float32),
        grid=grid,
        in_specs=[
            pl.BlockSpec((block_b, IN_PAD), lambda i: (i, 0)),  # x tiled over batch
            resident(w1_p.shape),                               # weights VMEM-resident
            resident(w2_p.shape),
            resident(w3_p.shape),
            resident(b_all.shape),
        ],
        out_specs=pl.BlockSpec((block_b, OUT_PAD), lambda i: (i, 0)),
        compiler_params=pltpu.CompilerParams(
            dimension_semantics=("parallel",),       # split batch grid over v7x's 2 TCs
            vmem_limit_bytes=32 * 1024 * 1024,       # ample headroom on v5e/v6e/v7x
        ),
    )(x_p, w1_p, w2_p, w3_p, b_all)

    return out_pad[:B, :OUT_FEATURES]


def init_params(key):
    """Deterministic init mimicking PyTorch nn.Linear (uniform +-1/sqrt(fan_in)).
    Weights stored as [in, out] (transposed vs. PyTorch's [out, in])."""
    def linear(k, fan_in, fan_out):
        kw, kb = jax.random.split(k)
        bound = 1.0 / jnp.sqrt(fan_in)
        w = jax.random.uniform(kw, (fan_in, fan_out), jnp.float32, -bound, bound)
        b = jax.random.uniform(kb, (fan_out,), jnp.float32, -bound, bound)
        return w, b

    k1, k2, k3 = jax.random.split(key, 3)
    w1, b1 = linear(k1, IN_FEATURES, H1)
    w2, b2 = linear(k2, H1, H2)
    w3, b3 = linear(k3, H2, OUT_FEATURES)
    return w1, b1, w2, b2, w3, b3


def nest_mlp_ref_f32(x, params):
    """Pure-f32 JAX reference (matches the PyTorch module's math)."""
    w1, b1, w2, b2, w3, b3 = params
    h = jnp.maximum(x @ w1 + b1, 0.0)
    h = jnp.maximum(h @ w2 + b2, 0.0)
    return h @ w3 + b3


def nest_mlp_ref_mixed(x, params):
    """Reference mirroring the kernel's precision (bf16 operands, f32 accum)."""
    w1, b1, w2, b2, w3, b3 = params
    bf = jnp.bfloat16
    h = jnp.dot(x.astype(bf), w1.astype(bf), preferred_element_type=jnp.float32) + b1
    h = jnp.maximum(h, 0.0)
    h = jnp.dot(h.astype(bf), w2.astype(bf), preferred_element_type=jnp.float32) + b2
    h = jnp.maximum(h, 0.0)
    return jnp.dot(h.astype(bf), w3.astype(bf), preferred_element_type=jnp.float32) + b3


if __name__ == "__main__":
    key = jax.random.PRNGKey(0)
    k_params, k_x = jax.random.split(key)

    params = init_params(k_params)
    # Batch=2, in_features=20 (as implied by nn.Linear(20, 64)).
    x = jax.random.uniform(k_x, (2, IN_FEATURES), jnp.float32)

    out = nest_mlp(x, params)
    out = jax.block_until_ready(out)
    assert out.shape == (2, OUT_FEATURES), out.shape

    # Exact-precision check vs. a reference using the same bf16/f32 mixed math.
    ref_mixed = nest_mlp_ref_mixed(x, params)
    assert jnp.allclose(out, ref_mixed, atol=1e-4, rtol=1e-4), "mismatch vs mixed-precision reference"

    # Sanity check vs. full-f32 math (bf16 operand rounding -> loose tolerance).
    ref_f32 = nest_mlp_ref_f32(x, params)
    assert jnp.allclose(out, ref_f32, atol=3e-2, rtol=3e-2), "mismatch vs f32 reference"

    print("KERNEL_OK")
</pallas_src>

<mosaic_0001>
module attributes {stable_mosaic.version = 11 : i64} {
  func.func @nest_mlp_kernel(%arg0: i32, %arg1: memref<512x32xbf16, #tpu.memory_space<vmem>>, %arg2: memref<32x64xbf16, #tpu.memory_space<vmem>>, %arg3: memref<64x32xbf16, #tpu.memory_space<vmem>>, %arg4: memref<32x128xbf16, #tpu.memory_space<vmem>>, %arg5: memref<3x128xf32, #tpu.memory_space<vmem>>, %arg6: memref<512x128xf32, #tpu.memory_space<vmem>>) attributes {dimension_semantics = [#tpu.dimension_semantics<parallel>], iteration_bounds = array<i64: 1>, scalar_prefetch = 0 : i64, scratch_operands = 0 : i64, tpu.core_type = #tpu.core_type<tc>, window_params = [{transform_indices = @transform_0, window_bounds = array<i64: 512, 32>}, {pipeline_mode = #tpu.pipeline_mode<synchronous>, transform_indices = @transform_1, window_bounds = array<i64: 32, 64>}, {pipeline_mode = #tpu.pipeline_mode<synchronous>, transform_indices = @transform_2, window_bounds = array<i64: 64, 32>}, {pipeline_mode = #tpu.pipeline_mode<synchronous>, transform_indices = @transform_3, window_bounds = array<i64: 32, 128>}, {pipeline_mode = #tpu.pipeline_mode<synchronous>, transform_indices = @transform_4, window_bounds = array<i64: 3, 128>}, {transform_indices = @transform_5, window_bounds = array<i64: 512, 128>}]} {
    %c0 = arith.constant 0 : index
    %c0_0 = arith.constant 0 : index
    %0 = vector.load %arg1[%c0, %c0_0] : memref<512x32xbf16, #tpu.memory_space<vmem>>, vector<512x32xbf16>
    %c0_1 = arith.constant 0 : index
    %c0_2 = arith.constant 0 : index
    %1 = vector.load %arg5[%c0_1, %c0_2] : memref<3x128xf32, #tpu.memory_space<vmem>>, vector<1x64xf32>
    %c1 = arith.constant 1 : index
    %c0_3 = arith.constant 0 : index
    %2 = vector.load %arg5[%c1, %c0_3] : memref<3x128xf32, #tpu.memory_space<vmem>>, vector<1x32xf32>
    %c2 = arith.constant 2 : index
    %c0_4 = arith.constant 0 : index
    %3 = vector.load %arg5[%c2, %c0_4] : memref<3x128xf32, #tpu.memory_space<vmem>>, vector<1x128xf32>
    %c0_5 = arith.constant 0 : index
    %c0_6 = arith.constant 0 : index
    %4 = vector.load %arg2[%c0_5, %c0_6] : memref<32x64xbf16, #tpu.memory_space<vmem>>, vector<32x64xbf16>
    %cst = arith.constant dense<0.000000e+00> : vector<512x64xf32>
    %5 = tpu.matmul %0, %4, %cst {dimension_numbers = #tpu.dot_dimension_numbers<[1], [0], [0], [1], [0, 0, 1, 1], [], []>} : vector<512x32xbf16>, vector<32x64xbf16>, vector<512x64xf32> -> vector<512x64xf32>
    %6 = vector.broadcast %1 : vector<1x64xf32> to vector<512x64xf32>
    %7 = arith.addf %5, %6 : vector<512x64xf32>
    %cst_7 = arith.constant 0.000000e+00 : f32
    %8 = vector.broadcast %cst_7 : f32 to vector<512x64xf32>
    %9 = arith.maximumf %7, %8 : vector<512x64xf32>
    %10 = arith.truncf %9 : vector<512x64xf32> to vector<512x64xbf16>
    %c0_8 = arith.constant 0 : index
    %c0_9 = arith.constant 0 : index
    %11 = vector.load %arg3[%c0_8, %c0_9] : memref<64x32xbf16, #tpu.memory_space<vmem>>, vector<64x32xbf16>
    %cst_10 = arith.constant dense<0.000000e+00> : vector<512x32xf32>
    %12 = tpu.matmul %10, %11, %cst_10 {dimension_numbers = #tpu.dot_dimension_numbers<[1], [0], [0], [1], [0, 0, 1, 1], [], []>} : vector<512x64xbf16>, vector<64x32xbf16>, vector<512x32xf32> -> vector<512x32xf32>
    %13 = vector.broadcast %2 : vector<1x32xf32> to vector<512x32xf32>
    %14 = arith.addf %12, %13 : vector<512x32xf32>
    %cst_11 = arith.constant 0.000000e+00 : f32
    %15 = vector.broadcast %cst_11 : f32 to vector<512x32xf32>
    %16 = arith.maximumf %14, %15 : vector<512x32xf32>
    %17 = arith.truncf %16 : vector<512x32xf32> to vector<512x32xbf16>
    %c0_12 = arith.constant 0 : index
    %c0_13 = arith.constant 0 : index
    %18 = vector.load %arg4[%c0_12, %c0_13] : memref<32x128xbf16, #tpu.memory_space<vmem>>, vector<32x128xbf16>
    %cst_14 = arith.constant dense<0.000000e+00> : vector<512x128xf32>
    %19 = tpu.matmul %17, %18, %cst_14 {dimension_numbers = #tpu.dot_dimension_numbers<[1], [0], [0], [1], [0, 0, 1, 1], [], []>} : vector<512x32xbf16>, vector<32x128xbf16>, vector<512x128xf32> -> vector<512x128xf32>
    %20 = vector.broadcast %3 : vector<1x128xf32> to vector<512x128xf32>
    %21 = arith.addf %19, %20 : vector<512x128xf32>
    %c0_15 = arith.constant 0 : index
    %c0_16 = arith.constant 0 : index
    %22 = vector.load %arg6[%c0_15, %c0_16] : memref<512x128xf32, #tpu.memory_space<vmem>>, vector<512x128xf32>
    tpu.vector_store %arg6[%c0_15, %c0_16], %21 {strides = array<i32>} : memref<512x128xf32, #tpu.memory_space<vmem>>, vector<512x128xf32>,
    return
  }
  func.func @transform_0(%arg0: i32) -> (i32, i32) {
    %c0_i32 = arith.constant 0 : i32
    %c0_i32_0 = arith.constant 0 : i32
    return %arg0, %c0_i32 : i32, i32
  }
  func.func @transform_1(%arg0: i32) -> (i32, i32) {
    %c0_i32 = arith.constant 0 : i32
    %c0_i32_0 = arith.constant 0 : i32
    %c0_i32_1 = arith.constant 0 : i32
    return %c0_i32, %c0_i32_0 : i32, i32
  }
  func.func @transform_2(%arg0: i32) -> (i32, i32) {
    %c0_i32 = arith.constant 0 : i32
    %c0_i32_0 = arith.constant 0 : i32
    %c0_i32_1 = arith.constant 0 : i32
    return %c0_i32, %c0_i32_0 : i32, i32
  }
  func.func @transform_3(%arg0: i32) -> (i32, i32) {
    %c0_i32 = arith.constant 0 : i32
    %c0_i32_0 = arith.constant 0 : i32
    %c0_i32_1 = arith.constant 0 : i32
    return %c0_i32, %c0_i32_0 : i32, i32
  }
  func.func @transform_4(%arg0: i32) -> (i32, i32) {
    %c0_i32 = arith.constant 0 : i32
    %c0_i32_0 = arith.constant 0 : i32
    %c0_i32_1 = arith.constant 0 : i32
    return %c0_i32, %c0_i32_0 : i32, i32
  }
  func.func @transform_5(%arg0: i32) -> (i32, i32) {
    %c0_i32 = arith.constant 0 : i32
    %c0_i32_0 = arith.constant 0 : i32
    return %arg0, %c0_i32 : i32, i32
  }
}

</mosaic_0001>

<llo_original>
// kernel: nest_mlp.1
$region0: #{nest_mlp.1}
  #allocation0 [shape = 'u32[]', space=smem, size = 0x4, offset = 0x4, fixed_abs, tag = 'smem constant byte address 0x4 - core index']
  #allocation1 [shape = 'u32[144,128]{1,0:T(1,128)}', space=vmem, size = 0x12000, scoped, tag = 'internal scratch']
  %s0 = inlined_call_operand.vmem [shape: bf16[512,32], index: 0, kind: input, shape index: {}]
  %s1 = inlined_call_operand.vmem [shape: bf16[32,64], index: 1, kind: input, shape index: {}]
  %s2 = inlined_call_operand.vmem [shape: bf16[64,32], index: 2, kind: input, shape index: {}]
  %s3 = inlined_call_operand.vmem [shape: bf16[32,128], index: 3, kind: input, shape index: {}]
  %s4 = inlined_call_operand.vmem [shape: f32[3,128], index: 4, kind: input, shape index: {}]
  %s5 = inlined_call_operand.vmem [shape: f32[512,128], index: 5, kind: output, shape index: {}]
  %s6 = sld [smem:[#allocation0]]
  $region30: #{nest_mlp.1} parent=0
    _
  %s8 = ssub.s32 1, %s6
  %s9 = scalar_select 0, %s8, %s6
  // Predicated region
  $region2: #{nest_mlp.1} parent=0 // pred_check
    _
  $region3: #{nest_mlp.1} parent=0 // pred_check_branch
    %11 = sbr.rel (0) target = $region5
  $region4: #{nest_mlp.1} parent=0 // pred_region
    _
  $region5: #{nest_mlp.1} parent=0 // pred_fallthru
    _
  // Predicated region
  $region6: #{nest_mlp.1} parent=0 // pred_check
    _
  $region7: #{nest_mlp.1} parent=0 // pred_check_branch
    %13 = sbr.rel (0) target = $region9
  $region8: #{nest_mlp.1} parent=0 // pred_region
    _
  $region9: #{nest_mlp.1} parent=0 // pred_fallthru
    _
  // Predicated region
  $region10: #{nest_mlp.1} parent=0 // pred_check
    _
  $region11: #{nest_mlp.1} parent=0 // pred_check_branch
    %15 = sbr.rel (0) target = $region13
  $region12: #{nest_mlp.1} parent=0 // pred_region
    _
  $region13: #{nest_mlp.1} parent=0 // pred_fallthru
    _
  // Predicated region
  $region14: #{nest_mlp.1} parent=0 // pred_check
    _
  $region15: #{nest_mlp.1} parent=0 // pred_check_branch
    %17 = sbr.rel (0) target = $region17
  $region16: #{nest_mlp.1} parent=0 // pred_region
    _
  $region17: #{nest_mlp.1} parent=0 // pred_fallthru
    _
  // Predicated region
  $region18: #{nest_mlp.1} parent=0 // pred_check
    _
  $region19: #{nest_mlp.1} parent=0 // pred_check_branch
    %19 = sbr.rel (0) target = $region21
  $region20: #{nest_mlp.1} parent=0 // pred_region
    _
  $region21: #{nest_mlp.1} parent=0 // pred_fallthru
    _
  %v21 = vld [vmem:[%s0] sm:$0xf]
  %v22 = vld [vmem:[%s0 + $0x4] sm:$0xf]
  %v23 = vld [vmem:[%s0 + $0x8] sm:$0xf]
  %v24 = vld [vmem:[%s0 + $0xc] sm:$0xf]
  %v25 = vld [vmem:[%s0 + $0x10] sm:$0xf]
  %v26 = vld [vmem:[%s0 + $0x14] sm:$0xf]
  %v27 = vld [vmem:[%s0 + $0x18] sm:$0xf]
  %v28 = vld [vmem:[%s0 + $0x1c] sm:$0xf]
  %v29 = vld [vmem:[%s0 + $0x20] sm:$0xf]
  %v30 = vld [vmem:[%s0 + $0x24] sm:$0xf]
  %v31 = vld [vmem:[%s0 + $0x28] sm:$0xf]
  %v32 = vld [vmem:[%s0 + $0x2c] sm:$0xf]
  %v33 = vld [vmem:[%s0 + $0x30] sm:$0xf]
  %v34 = vld [vmem:[%s0 + $0x34] sm:$0xf]
  %v35 = vld [vmem:[%s0 + $0x38] sm:$0xf]
  %v36 = vld [vmem:[%s0 + $0x3c] sm:$0xf]
  %v37 = vld [vmem:[%s0 + $0x40] sm:$0xf]
  %v38 = vld [vmem:[%s0 + $0x44] sm:$0xf]
  %v39 = vld [vmem:[%s0 + $0x48] sm:$0xf]
  %v40 = vld [vmem:[%s0 + $0x4c] sm:$0xf]
  %v41 = vld [vmem:[%s0 + $0x50] sm:$0xf]
  %v42 = vld [vmem:[%s0 + $0x54] sm:$0xf]
  %v43 = vld [vmem:[%s0 + $0x58] sm:$0xf]
  %v44 = vld [vmem:[%s0 + $0x5c] sm:$0xf]
  %v45 = vld [vmem:[%s0 + $0x60] sm:$0xf]
  %v46 = vld [vmem:[%s0 + $0x64] sm:$0xf]
  %v47 = vld [vmem:[%s0 + $0x68] sm:$0xf]
  %v48 = vld [vmem:[%s0 + $0x6c] sm:$0xf]
  %v49 = vld [vmem:[%s0 + $0x70] sm:$0xf]
  %v50 = vld [vmem:[%s0 + $0x74] sm:$0xf]
  %v51 = vld [vmem:[%s0 + $0x78] sm:$0xf]
  %v52 = vld [vmem:[%s0 + $0x7c] sm:$0xf]
  %v53 = vld [vmem:[%s0 + $0x80] sm:$0xf]
  %v54 = vld [vmem:[%s0 + $0x84] sm:$0xf]
  %v55 = vld [vmem:[%s0 + $0x88] sm:$0xf]
  %v56 = vld [vmem:[%s0 + $0x8c] sm:$0xf]
  %v57 = vld [vmem:[%s0 + $0x90] sm:$0xf]
  %v58 = vld [vmem:[%s0 + $0x94] sm:$0xf]
  %v59 = vld [vmem:[%s0 + $0x98] sm:$0xf]
  %v60 = vld [vmem:[%s0 + $0x9c] sm:$0xf]
  %v61 = vld [vmem:[%s0 + $0xa0] sm:$0xf]
  %v62 = vld [vmem:[%s0 + $0xa4] sm:$0xf]
  %v63 = vld [vmem:[%s0 + $0xa8] sm:$0xf]
  %v64 = vld [vmem:[%s0 + $0xac] sm:$0xf]
  %v65 = vld [vmem:[%s0 + $0xb0] sm:$0xf]
  %v66 = vld [vmem:[%s0 + $0xb4] sm:$0xf]
  %v67 = vld [vmem:[%s0 + $0xb8] sm:$0xf]
  %v68 = vld [vmem:[%s0 + $0xbc] sm:$0xf]
  %v69 = vld [vmem:[%s0 + $0xc0] sm:$0xf]
  %v70 = vld [vmem:[%s0 + $0xc4] sm:$0xf]
  %v71 = vld [vmem:[%s0 + $0xc8] sm:$0xf]
  %v72 = vld [vmem:[%s0 + $0xcc] sm:$0xf]
  %v73 = vld [vmem:[%s0 + $0xd0] sm:$0xf]
  %v74 = vld [vmem:[%s0 + $0xd4] sm:$0xf]
  %v75 = vld [vmem:[%s0 + $0xd8] sm:$0xf]
  %v76 = vld [vmem:[%s0 + $0xdc] sm:$0xf]
  %v77 = vld [vmem:[%s0 + $0xe0] sm:$0xf]
  %v78 = vld [vmem:[%s0 + $0xe4] sm:$0xf]
  %v79 = vld [vmem:[%s0 + $0xe8] sm:$0xf]
  %v80 = vld [vmem:[%s0 + $0xec] sm:$0xf]
  %v81 = vld [vmem:[%s0 + $0xf0] sm:$0xf]
  %v82 = vld [vmem:[%s0 + $0xf4] sm:$0xf]
  %v83 = vld [vmem:[%s0 + $0xf8] sm:$0xf]
  %v84 = vld [vmem:[%s0 + $0xfc] sm:$0xf]
  %v85 = vld [vmem:[%s4] sm:$0x1]
  %v86 = vld [vmem:[%s4 + $0x1] sm:$0x1]
  %v87 = vld [vmem:[%s4 + $0x2] sm:$0x1]
  %v88 = vld [vmem:[%s1] sm:$0xf]
  %v89 = vld [vmem:[%s1 + $0x4] sm:$0xf]
  %v90 = vld [vmem:[%s1 + $0x8] sm:$0xf]
  %v91 = vld [vmem:[%s1 + $0xc] sm:$0xf]
  %v92 = vlaneseq
  %v93 = vshrl.u32 %v92, 7
  %v94 = vsub.s32 0, %v93
  %v95 = vrot.slane %v85, %v94
  %v160 = vunpack.c.l.b16 %v21
  %v161 = vunpack.c.l.b16 %v22
  %v162 = vunpack.c.l.b16 %v23
  %v163 = vunpack.c.l.b16 %v24
  %v164 = vunpack.c.l.b16 %v25
  %v165 = vunpack.c.l.b16 %v26
  %v166 = vunpack.c.l.b16 %v27
  %v167 = vunpack.c.l.b16 %v28
  %v168 = vunpack.c.l.b16 %v29
  %v169 = vunpack.c.l.b16 %v30
  %v170 = vunpack.c.l.b16 %v31
  %v171 = vunpack.c.l.b16 %v32
  %v172 = vunpack.c.l.b16 %v33
  %v173 = vunpack.c.l.b16 %v34
  %v174 = vunpack.c.l.b16 %v35
  %v175 = vunpack.c.l.b16 %v36
  %v176 = vunpack.c.l.b16 %v37
  %v177 = vunpack.c.l.b16 %v38
  %v178 = vunpack.c.l.b16 %v39
  %v179 = vunpack.c.l.b16 %v40
  %v180 = vunpack.c.l.b16 %v41
  %v181 = vunpack.c.l.b16 %v42
  %v182 = vunpack.c.l.b16 %v43
  %v183 = vunpack.c.l.b16 %v44
  %v184 = vunpack.c.l.b16 %v45
  %v185 = vunpack.c.l.b16 %v46
  %v186 = vunpack.c.l.b16 %v47
  %v187 = vunpack.c.l.b16 %v48
  %v188 = vunpack.c.l.b16 %v49
  %v189 = vunpack.c.l.b16 %v50
  %v190 = vunpack.c.l.b16 %v51
  %v191 = vunpack.c.l.b16 %v52
  %v192 = vunpack.c.l.b16 %v53
  %v193 = vunpack.c.l.b16 %v54
  %v194 = vunpack.c.l.b16 %v55
  %v195 = vunpack.c.l.b16 %v56
  %v196 = vunpack.c.l.b16 %v57
  %v197 = vunpack.c.l.b16 %v58
  %v198 = vunpack.c.l.b16 %v59
  %v199 = vunpack.c.l.b16 %v60
  %v200 = vunpack.c.l.b16 %v61
  %v201 = vunpack.c.l.b16 %v62
  %v202 = vunpack.c.l.b16 %v63
  %v203 = vunpack.c.l.b16 %v64
  %v204 = vunpack.c.l.b16 %v65
  %v205 = vunpack.c.l.b16 %v66
  %v206 = vunpack.c.l.b16 %v67
  %v207 = vunpack.c.l.b16 %v68
  %v208 = vunpack.c.l.b16 %v69
  %v209 = vunpack.c.l.b16 %v70
  %v210 = vunpack.c.l.b16 %v71
  %v211 = vunpack.c.l.b16 %v72
  %v212 = vunpack.c.l.b16 %v73
  %v213 = vunpack.c.l.b16 %v74
  %v214 = vunpack.c.l.b16 %v75
  %v215 = vunpack.c.l.b16 %v76
  %v216 = vunpack.c.l.b16 %v77
  %v217 = vunpack.c.l.b16 %v78
  %v218 = vunpack.c.l.b16 %v79
  %v219 = vunpack.c.l.b16 %v80
  %v220 = vunpack.c.l.b16 %v81
  %v221 = vunpack.c.l.b16 %v82
  %v222 = vunpack.c.l.b16 %v83
  %v223 = vunpack.c.l.b16 %v84
  %v224 = vpack.c.b16 %v161, %v160
  %v225 = vpack.c.b16 %v163, %v162
  %v226 = vpack.c.b16 %v165, %v164
  %v227 = vpack.c.b16 %v167, %v166
  %v228 = vpack.c.b16 %v169, %v168
  %v229 = vpack.c.b16 %v171, %v170
  %v230 = vpack.c.b16 %v173, %v172
  %v231 = vpack.c.b16 %v175, %v174
  %v232 = vpack.c.b16 %v177, %v176
  %v233 = vpack.c.b16 %v179, %v178
  %v234 = vpack.c.b16 %v181, %v180
  %v235 = vpack.c.b16 %v183, %v182
  %v236 = vpack.c.b16 %v185, %v184
  %v237 = vpack.c.b16 %v187, %v186
  %v238 = vpack.c.b16 %v189, %v188
  %v239 = vpack.c.b16 %v191, %v190
  %v240 = vpack.c.b16 %v193, %v192
  %v241 = vpack.c.b16 %v195, %v194
  %v242 = vpack.c.b16 %v197, %v196
  %v243 = vpack.c.b16 %v199, %v198
  %v244 = vpack.c.b16 %v201, %v200
  %v245 = vpack.c.b16 %v203, %v202
  %v246 = vpack.c.b16 %v205, %v204
  %v247 = vpack.c.b16 %v207, %v206
  %v248 = vpack.c.b16 %v209, %v208
  %v249 = vpack.c.b16 %v211, %v210
  %v250 = vpack.c.b16 %v213, %v212
  %v251 = vpack.c.b16 %v215, %v214
  %v252 = vpack.c.b16 %v217, %v216
  %v253 = vpack.c.b16 %v219, %v218
  %v254 = vpack.c.b16 %v221, %v220
  %v255 = vpack.c.b16 %v223, %v222
  %v260 = vunpack.c.l.b16 %v88
  %v261 = vunpack.c.l.b16 %v89
  %v262 = vunpack.c.l.b16 %v90
  %v263 = vunpack.c.l.b16 %v91
  %v264 = vpack.c.b16 %v261, %v260
  %v265 = vpack.c.b16 %v263, %v262
  %vm268 = vcmask 261120
  %v270 = vsel %vm268, %v224, 0
  %v273 = vsel %vm268, %v225, 0
  %v276 = vsel %vm268, %v226, 0
  %v279 = vsel %vm268, %v227, 0
  %v282 = vsel %vm268, %v228, 0
  %v285 = vsel %vm268, %v229, 0
  %v288 = vsel %vm268, %v230, 0
  %v291 = vsel %vm268, %v231, 0
  %v294 = vsel %vm268, %v232, 0
  %v297 = vsel %vm268, %v233, 0
  %v300 = vsel %vm268, %v234, 0
  %v303 = vsel %vm268, %v235, 0
  %v306 = vsel %vm268, %v236, 0
  %v309 = vsel %vm268, %v237, 0
  %v312 = vsel %vm268, %v238, 0
  %v315 = vsel %vm268, %v239, 0
  %v318 = vsel %vm268, %v240, 0
  %v321 = vsel %vm268, %v241, 0
  %v324 = vsel %vm268, %v242, 0
  %v327 = vsel %vm268, %v243, 0
  %v330 = vsel %vm268, %v244, 0
  %v333 = vsel %vm268, %v245, 0
  %v336 = vsel %vm268, %v246, 0
  %v339 = vsel %vm268, %v247, 0
  %v342 = vsel %vm268, %v248, 0
  %v345 = vsel %vm268, %v249, 0
  %v348 = vsel %vm268, %v250, 0
  %v351 = vsel %vm268, %v251, 0
  %v354 = vsel %vm268, %v252, 0
  %v357 = vsel %vm268, %v253, 0
  %v360 = vsel %vm268, %v254, 0
  %v363 = vsel %vm268, %v255, 0
  %365 = vmatprep.subr.bf16.mxu0 0
  %366 = vmatpush1.bf16.msra.mxu0 0
  %367 = vmatprep.subr.bf16.mxu0 0
  %368 = vmatpush1.bf16.msra.mxu0 0
  %369 = vmatprep.subr.bf16.mxu0 0
  %370 = vmatpush1.bf16.msra.mxu0 0
  %371 = vmatprep.subr.bf16.mxu0 0
  %372 = vmatpush1.bf16.msra.mxu0 0
  %373 = vmatprep.subr.bf16.mxu0 0
  %374 = vmatpush1.bf16.msra.mxu0 0
  %375 = vmatprep.subr.bf16.mxu0 0
  %376 = vmatpush1.bf16.msra.mxu0 0
  %377 = vmatprep.subr.bf16.mxu0 0
  %378 = vmatpush1.bf16.msra.mxu0 %v265
  %379 = vmatprep.subr.bf16.mxu0 0
  %380 = vmatpush1.bf16.msra.mxu0 %v264
  %381 = vmatprep.subr.bf16.mxu0 0
  %382 = vmatpush2.bf16.msra.mxu0 0
  %383 = vmatprep.subr.bf16.mxu0 0
  %384 = vmatpush2.bf16.msra.mxu0 0
  %385 = vmatprep.subr.bf16.mxu0 0
  %386 = vmatpush2.bf16.msra.mxu0 0
  %387 = vmatprep.subr.bf16.mxu0 0
  %388 = vmatpush2.bf16.msra.mxu0 0
  %389 = vmatprep.subr.bf16.mxu0 0
  %390 = vmatpush2.bf16.msra.mxu0 0
  %391 = vmatprep.subr.bf16.mxu0 0
  %392 = vmatpush2.bf16.msra.mxu0 0
  %393 = vmatprep.subr.bf16.mxu0 0
  %394 = vmatpush2.bf16.msra.mxu0 0
  %395 = vmatprep.subr.bf16.mxu0 0
  %396 = vmatpush2.bf16.msra.mxu0 0
  %397 = vmatprep.mubr.bf16.mxu0 0
  %398 = vmatmul.mubr.bf16.gmra.mxu0 %v270
  %v399 = vpop.f32.mrf.mxu0
  %v400 = vadd.f32 %v95, %v399
  %v401 = vpop.f32.mrf.mxu0
  %v402 = vpop.f32.mrf.mxu0
  %v403 = vadd.f32 %v95, %v402
  %v404 = vpop.f32.mrf.mxu0
  %405 = vmatprep.mubr.bf16.mxu0 0
  %406 = vmatmul.mubr.bf16.gmra.mxu0 %v273
  %v407 = vpop.f32.mrf.mxu0
  %v408 = vadd.f32 %v95, %v407
  %v409 = vpop.f32.mrf.mxu0
  %v410 = vpop.f32.mrf.mxu0
  %v411 = vadd.f32 %v95, %v410
  %v412 = vpop.f32.mrf.mxu0
  %413 = vmatprep.mubr.bf16.mxu0 0
  %414 = vmatmul.mubr.bf16.gmra.mxu0 %v276
  %v415 = vpop.f32.mrf.mxu0
  %v416 = vadd.f32 %v95, %v415
  %v417 = vpop.f32.mrf.mxu0
  %v418 = vpop.f32.mrf.mxu0
  %v419 = vadd.f32 %v95, %v418
  %v420 = vpop.f32.mrf.mxu0
  %421 = vmatprep.mubr.bf16.mxu0 0
  %422 = vmatmul.mubr.bf16.gmra.mxu0 %v279
  %v423 = vpop.f32.mrf.mxu0
  %v424 = vadd.f32 %v95, %v423
  %v425 = vpop.f32.mrf.mxu0
  %v426 = vpop.f32.mrf.mxu0
  %v427 = vadd.f32 %v95, %v426
  %v428 = vpop.f32.mrf.mxu0
  %429 = vmatprep.mubr.bf16.mxu0 0
  %430 = vmatmul.mubr.bf16.gmra.mxu0 %v282
  %v431 = vpop.f32.mrf.mxu0
  %v432 = vadd.f32 %v95, %v431
  %v433 = vpop.f32.mrf.mxu0
  %v434 = vpop.f32.mrf.mxu0
  %v435 = vadd.f32 %v95, %v434
  %v436 = vpop.f32.mrf.mxu0
  %437 = vmatprep.mubr.bf16.mxu0 0
  %438 = vmatmul.mubr.bf16.gmra.mxu0 %v285
  %v439 = vpop.f32.mrf.mxu0
  %v440 = vadd.f32 %v95, %v439
  %v441 = vpop.f32.mrf.mxu0
  %v442 = vpop.f32.mrf.mxu0
  %v443 = vadd.f32 %v95, %v442
  %v444 = vpop.f32.mrf.mxu0
  %445 = vmatprep.mubr.bf16.mxu0 0
  %446 = vmatmul.mubr.bf16.gmra.mxu0 %v288
  %v447 = vpop.f32.mrf.mxu0
  %v448 = vadd.f32 %v95, %v447
  %v449 = vpop.f32.mrf.mxu0
  %v450 = vpop.f32.mrf.mxu0
  %v451 = vadd.f32 %v95, %v450
  %v452 = vpop.f32.mrf.mxu0
  %453 = vmatprep.mubr.bf16.mxu0 0
  %454 = vmatmul.mubr.bf16.gmra.mxu0 %v291
  %v455 = vpop.f32.mrf.mxu0
  %v456 = vadd.f32 %v95, %v455
  %v457 = vpop.f32.mrf.mxu0
  %v458 = vpop.f32.mrf.mxu0
  %v459 = vadd.f32 %v95, %v458
  %v460 = vpop.f32.mrf.mxu0
  %461 = vmatprep.mubr.bf16.mxu0 0
  %462 = vmatmul.mubr.bf16.gmra.mxu0 %v294
  %v463 = vpop.f32.mrf.mxu0
  %v464 = vadd.f32 %v95, %v463
  %v465 = vpop.f32.mrf.mxu0
  %v466 = vpop.f32.mrf.mxu0
  %v467 = vadd.f32 %v95, %v466
  %v468 = vpop.f32.mrf.mxu0
  %469 = vmatprep.mubr.bf16.mxu0 0
  %470 = vmatmul.mubr.bf16.gmra.mxu0 %v297
  %v471 = vpop.f32.mrf.mxu0
  %v472 = vadd.f32 %v95, %v471
  %v473 = vpop.f32.mrf.mxu0
  %v474 = vpop.f32.mrf.mxu0
  %v475 = vadd.f32 %v95, %v474
  %v476 = vpop.f32.mrf.mxu0
  %477 = vmatprep.mubr.bf16.mxu0 0
  %478 = vmatmul.mubr.bf16.gmra.mxu0 %v300
  %v479 = vpop.f32.mrf.mxu0
  %v480 = vadd.f32 %v95, %v479
  %v481 = vpop.f32.mrf.mxu0
  %v482 = vpop.f32.mrf.mxu0
  %v483 = vadd.f32 %v95, %v482
  %v484 = vpop.f32.mrf.mxu0
  %485 = vmatprep.mubr.bf16.mxu0 0
  %486 = vmatmul.mubr.bf16.gmra.mxu0 %v303
  %v487 = vpop.f32.mrf.mxu0
  %v488 = vadd.f32 %v95, %v487
  %v489 = vpop.f32.mrf.mxu0
  %v490 = vpop.f32.mrf.mxu0
  %v491 = vadd.f32 %v95, %v490
  %v492 = vpop.f32.mrf.mxu0
  %493 = vmatprep.mubr.bf16.mxu0 0
  %494 = vmatmul.mubr.bf16.gmra.mxu0 %v306
  %v495 = vpop.f32.mrf.mxu0
  %v496 = vadd.f32 %v95, %v495
  %v497 = vpop.f32.mrf.mxu0
  %v498 = vpop.f32.mrf.mxu0
  %v499 = vadd.f32 %v95, %v498
  %v500 = vpop.f32.mrf.mxu0
  %501 = vmatprep.mubr.bf16.mxu0 0
  %502 = vmatmul.mubr.bf16.gmra.mxu0 %v309
  %v503 = vpop.f32.mrf.mxu0
  %v504 = vadd.f32 %v95, %v503
  %v505 = vpop.f32.mrf.mxu0
  %v506 = vpop.f32.mrf.mxu0
  %v507 = vadd.f32 %v95, %v506
  %v508 = vpop.f32.mrf.mxu0
  %509 = vmatprep.mubr.bf16.mxu0 0
  %510 = vmatmul.mubr.bf16.gmra.mxu0 %v312
  %v511 = vpop.f32.mrf.mxu0
  %v512 = vadd.f32 %v95, %v511
  %v513 = vpop.f32.mrf.mxu0
  %v514 = vpop.f32.mrf.mxu0
  %v515 = vadd.f32 %v95, %v514
  %v516 = vpop.f32.mrf.mxu0
  %517 = vmatprep.mubr.bf16.mxu0 0
  %518 = vmatmul.mubr.bf16.gmra.mxu0 %v315
  %v519 = vpop.f32.mrf.mxu0
  %v520 = vadd.f32 %v95, %v519
  %v521 = vpop.f32.mrf.mxu0
  %v522 = vpop.f32.mrf.mxu0
  %v523 = vadd.f32 %v95, %v522
  %v524 = vpop.f32.mrf.mxu0
  %525 = vmatprep.mubr.bf16.mxu0 0
  %526 = vmatmul.mubr.bf16.gmra.mxu0 %v318
  %v527 = vpop.f32.mrf.mxu0
  %v528 = vadd.f32 %v95, %v527
  %v529 = vpop.f32.mrf.mxu0
  %v530 = vpop.f32.mrf.mxu0
  %v531 = vadd.f32 %v95, %v530
  %v532 = vpop.f32.mrf.mxu0
  %533 = vmatprep.mubr.bf16.mxu0 0
  %534 = vmatmul.mubr.bf16.gmra.mxu0 %v321
  %v535 = vpop.f32.mrf.mxu0
  %v536 = vadd.f32 %v95, %v535
  %v537 = vpop.f32.mrf.mxu0
  %v538 = vpop.f32.mrf.mxu0
  %v539 = vadd.f32 %v95, %v538
  %v540 = vpop.f32.mrf.mxu0
  %541 = vmatprep.mubr.bf16.mxu0 0
  %542 = vmatmul.mubr.bf16.gmra.mxu0 %v324
  %v543 = vpop.f32.mrf.mxu0
  %v544 = vadd.f32 %v95, %v543
  %v545 = vpop.f32.mrf.mxu0
  %v546 = vpop.f32.mrf.mxu0
  %v547 = vadd.f32 %v95, %v546
  %v548 = vpop.f32.mrf.mxu0
  %549 = vmatprep.mubr.bf16.mxu0 0
  %550 = vmatmul.mubr.bf16.gmra.mxu0 %v327
  %v551 = vpop.f32.mrf.mxu0
  %v552 = vadd.f32 %v95, %v551
  %v553 = vpop.f32.mrf.mxu0
  %v554 = vpop.f32.mrf.mxu0
  %v555 = vadd.f32 %v95, %v554
  %v556 = vpop.f32.mrf.mxu0
  %557 = vmatprep.mubr.bf16.mxu0 0
  %558 = vmatmul.mubr.bf16.gmra.mxu0 %v330
  %v559 = vpop.f32.mrf.mxu0
  %v560 = vadd.f32 %v95, %v559
  %v561 = vpop.f32.mrf.mxu0
  %v562 = vpop.f32.mrf.mxu0
  %v563 = vadd.f32 %v95, %v562
  %v564 = vpop.f32.mrf.mxu0
  %565 = vmatprep.mubr.bf16.mxu0 0
  %566 = vmatmul.mubr.bf16.gmra.mxu0 %v333
  %v567 = vpop.f32.mrf.mxu0
  %v568 = vadd.f32 %v95, %v567
  %v569 = vpop.f32.mrf.mxu0
  %v570 = vpop.f32.mrf.mxu0
  %v571 = vadd.f32 %v95, %v570
  %v572 = vpop.f32.mrf.mxu0
  %573 = vmatprep.mubr.bf16.mxu0 0
  %574 = vmatmul.mubr.bf16.gmra.mxu0 %v336
  %v575 = vpop.f32.mrf.mxu0
  %v576 = vadd.f32 %v95, %v575
  %v577 = vpop.f32.mrf.mxu0
  %v578 = vpop.f32.mrf.mxu0
  %v579 = vadd.f32 %v95, %v578
  %v580 = vpop.f32.mrf.mxu0
  %581 = vmatprep.mubr.bf16.mxu0 0
  %582 = vmatmul.mubr.bf16.gmra.mxu0 %v339
  %v583 = vpop.f32.mrf.mxu0
  %v584 = vadd.f32 %v95, %v583
  %v585 = vpop.f32.mrf.mxu0
  %v586 = vpop.f32.mrf.mxu0
  %v587 = vadd.f32 %v95, %v586
  %v588 = vpop.f32.mrf.mxu0
  %589 = vmatprep.mubr.bf16.mxu0 0
  %590 = vmatmul.mubr.bf16.gmra.mxu0 %v342
  %v591 = vpop.f32.mrf.mxu0
  %v592 = vadd.f32 %v95, %v591
  %v593 = vpop.f32.mrf.mxu0
  %v594 = vpop.f32.mrf.mxu0
  %v595 = vadd.f32 %v95, %v594
  %v596 = vpop.f32.mrf.mxu0
  %597 = vmatprep.mubr.bf16.mxu0 0
  %598 = vmatmul.mubr.bf16.gmra.mxu0 %v345
  %v599 = vpop.f32.mrf.mxu0
  %v600 = vadd.f32 %v95, %v599
  %v601 = vpop.f32.mrf.mxu0
  %v602 = vpop.f32.mrf.mxu0
  %v603 = vadd.f32 %v95, %v602
  %v604 = vpop.f32.mrf.mxu0
  %605 = vmatprep.mubr.bf16.mxu0 0
  %606 = vmatmul.mubr.bf16.gmra.mxu0 %v348
  %v607 = vpop.f32.mrf.mxu0
  %v608 = vadd.f32 %v95, %v607
  %v609 = vpop.f32.mrf.mxu0
  %v610 = vpop.f32.mrf.mxu0
  %v611 = vadd.f32 %v95, %v610
  %v612 = vpop.f32.mrf.mxu0
  %613 = vmatprep.mubr.bf16.mxu0 0
  %614 = vmatmul.mubr.bf16.gmra.mxu0 %v351
  %v615 = vpop.f32.mrf.mxu0
  %v616 = vadd.f32 %v95, %v615
  %v617 = vpop.f32.mrf.mxu0
  %v618 = vpop.f32.mrf.mxu0
  %v619 = vadd.f32 %v95, %v618
  %v620 = vpop.f32.mrf.mxu0
  %621 = vmatprep.mubr.bf16.mxu0 0
  %622 = vmatmul.mubr.bf16.gmra.mxu0 %v354
  %v623 = vpop.f32.mrf.mxu0
  %v624 = vadd.f32 %v95, %v623
  %v625 = vpop.f32.mrf.mxu0
  %v626 = vpop.f32.mrf.mxu0
  %v627 = vadd.f32 %v95, %v626
  %v628 = vpop.f32.mrf.mxu0
  %629 = vmatprep.mubr.bf16.mxu0 0
  %630 = vmatmul.mubr.bf16.gmra.mxu0 %v357
  %v631 = vpop.f32.mrf.mxu0
  %v632 = vadd.f32 %v95, %v631
  %v633 = vpop.f32.mrf.mxu0
  %v634 = vpop.f32.mrf.mxu0
  %v635 = vadd.f32 %v95, %v634
  %v636 = vpop.f32.mrf.mxu0
  %637 = vmatprep.mubr.bf16.mxu0 0
  %638 = vmatmul.mubr.bf16.gmra.mxu0 %v360
  %v639 = vpop.f32.mrf.mxu0
  %v640 = vadd.f32 %v95, %v639
  %v641 = vpop.f32.mrf.mxu0
  %v642 = vpop.f32.mrf.mxu0
  %v643 = vadd.f32 %v95, %v642
  %v644 = vpop.f32.mrf.mxu0
  %645 = vmatprep.mubr.bf16.mxu0 0
  %646 = vmatmul.mubr.bf16.gmra.mxu0 %v363
  %v647 = vpop.f32.mrf.mxu0
  %v648 = vadd.f32 %v95, %v647
  %v649 = vpop.f32.mrf.mxu0
  %v650 = vpop.f32.mrf.mxu0
  %v651 = vadd.f32 %v95, %v650
  %v652 = vpop.f32.mrf.mxu0
  %653 = vdwg.mxu0
  %v654 = vmax.f32 %v400, 0.0
  %v655 = vmax.f32 %v403, 0.0
  %v656 = vmax.f32 %v408, 0.0
  %v657 = vmax.f32 %v411, 0.0
  %v658 = vmax.f32 %v416, 0.0
  %v659 = vmax.f32 %v419, 0.0
  %v660 = vmax.f32 %v424, 0.0
  %v661 = vmax.f32 %v427, 0.0
  %v662 = vmax.f32 %v432, 0.0
  %v663 = vmax.f32 %v435, 0.0
  %v664 = vmax.f32 %v440, 0.0
  %v665 = vmax.f32 %v443, 0.0
  %v666 = vmax.f32 %v448, 0.0
  %v667 = vmax.f32 %v451, 0.0
  %v668 = vmax.f32 %v456, 0.0
  %v669 = vmax.f32 %v459, 0.0
  %v670 = vmax.f32 %v464, 0.0
  %v671 = vmax.f32 %v467, 0.0
  %v672 = vmax.f32 %v472, 0.0
  %v673 = vmax.f32 %v475, 0.0
  %v674 = vmax.f32 %v480, 0.0
  %v675 = vmax.f32 %v483, 0.0
  %v676 = vmax.f32 %v488, 0.0
  %v677 = vmax.f32 %v491, 0.0
  %v678 = vmax.f32 %v496, 0.0
  %v679 = vmax.f32 %v499, 0.0
  %v680 = vmax.f32 %v504, 0.0
  %v681 = vmax.f32 %v507, 0.0
  %v682 = vmax.f32 %v512, 0.0
  %v683 = vmax.f32 %v515, 0.0
  %v684 = vmax.f32 %v520, 0.0
  %v685 = vmax.f32 %v523, 0.0
  %v686 = vmax.f32 %v528, 0.0
  %v687 = vmax.f32 %v531, 0.0
  %v688 = vmax.f32 %v536, 0.0
  %v689 = vmax.f32 %v539, 0.0
  %v690 = vmax.f32 %v544, 0.0
  %v691 = vmax.f32 %v547, 0.0
  %v692 = vmax.f32 %v552, 0.0
  %v693 = vmax.f32 %v555, 0.0
  %v694 = vmax.f32 %v560, 0.0
  %v695 = vmax.f32 %v563, 0.0
  %v696 = vmax.f32 %v568, 0.0
  %v697 = vmax.f32 %v571, 0.0
  %v698 = vmax.f32 %v576, 0.0
  %v699 = vmax.f32 %v579, 0.0
  %v700 = vmax.f32 %v584, 0.0
  %v701 = vmax.f32 %v587, 0.0
  %v702 = vmax.f32 %v592, 0.0
  %v703 = vmax.f32 %v595, 0.0
  %v704 = vmax.f32 %v600, 0.0
  %v705 = vmax.f32 %v603, 0.0
  %v706 = vmax.f32 %v608, 0.0
  %v707 = vmax.f32 %v611, 0.0
  %v708 = vmax.f32 %v616, 0.0
  %v709 = vmax.f32 %v619, 0.0
  %v710 = vmax.f32 %v624, 0.0
  %v711 = vmax.f32 %v627, 0.0
  %v712 = vmax.f32 %v632, 0.0
  %v713 = vmax.f32 %v635, 0.0
  %v714 = vmax.f32 %v640, 0.0
  %v715 = vmax.f32 %v643, 0.0
  %v716 = vmax.f32 %v648, 0.0
  %v717 = vmax.f32 %v651, 0.0
  %v718 = vpack.c.bf16 %v655, %v654
  %v719 = vpack.c.bf16 %v657, %v656
  %v720 = vpack.c.bf16 %v659, %v658
  %v721 = vpack.c.bf16 %v661, %v660
  %v722 = vpack.c.bf16 %v663, %v662
  %v723 = vpack.c.bf16 %v665, %v664
  %v724 = vpack.c.bf16 %v667, %v666
  %v725 = vpack.c.bf16 %v669, %v668
  %v726 = vpack.c.bf16 %v671, %v670
  %v727 = vpack.c.bf16 %v673, %v672
  %v728 = vpack.c.bf16 %v675, %v674
  %v729 = vpack.c.bf16 %v677, %v676
  %v730 = vpack.c.bf16 %v679, %v678
  %v731 = vpack.c.bf16 %v681, %v680
  %v732 = vpack.c.bf16 %v683, %v682
  %v733 = vpack.c.bf16 %v685, %v684
  %v734 = vpack.c.bf16 %v687, %v686
  %v735 = vpack.c.bf16 %v689, %v688
  %v736 = vpack.c.bf16 %v691, %v690
  %v737 = vpack.c.bf16 %v693, %v692
  %v738 = vpack.c.bf16 %v695, %v694
  %v739 = vpack.c.bf16 %v697, %v696
  %v740 = vpack.c.bf16 %v699, %v698
  %v741 = vpack.c.bf16 %v701, %v700
  %v742 = vpack.c.bf16 %v703, %v702
  %v743 = vpack.c.bf16 %v705, %v704
  %v744 = vpack.c.bf16 %v707, %v706
  %v745 = vpack.c.bf16 %v709, %v708
  %v746 = vpack.c.bf16 %v711, %v710
  %v747 = vpack.c.bf16 %v713, %v712
  %v748 = vpack.c.bf16 %v715, %v714
  %v749 = vpack.c.bf16 %v717, %v716
  %v750 = vld [vmem:[%s2] sm:$0xf]
  %v751 = vld [vmem:[%s2 + $0x4] sm:$0xf]
  %v752 = vld [vmem:[%s2 + $0x8] sm:$0xf]
  %v753 = vld [vmem:[%s2 + $0xc] sm:$0xf]
  %v754 = vld [vmem:[%s2 + $0x10] sm:$0xf]
  %v755 = vld [vmem:[%s2 + $0x14] sm:$0xf]
  %v756 = vld [vmem:[%s2 + $0x18] sm:$0xf]
  %v757 = vld [vmem:[%s2 + $0x1c] sm:$0xf]
  %v758 = vlaneseq
  %v759 = vshrl.u32 %v758, 7
  %v760 = vsub.s32 0, %v759
  %v761 = vrot.slane %v86, %v760
  %v770 = vunpack.c.l.b16 %v750
  %v771 = vunpack.c.l.b16 %v751
  %v772 = vunpack.c.l.b16 %v752
  %v773 = vunpack.c.l.b16 %v753
  %v774 = vunpack.c.l.b16 %v754
  %v775 = vunpack.c.l.b16 %v755
  %v776 = vunpack.c.l.b16 %v756
  %v777 = vunpack.c.l.b16 %v757
  %v778 = vpack.c.b16 %v771, %v770
  %v779 = vpack.c.b16 %v773, %v772
  %v780 = vpack.c.b16 %v775, %v774
  %v781 = vpack.c.b16 %v777, %v776
  %vm786 = vcmask 523264
  %v788 = vsel %vm786, %v718, 0
  %v791 = vsel %vm786, %v719, 0
  %v794 = vsel %vm786, %v720, 0
  %v797 = vsel %vm786, %v721, 0
  %v800 = vsel %vm786, %v722, 0
  %v803 = vsel %vm786, %v723, 0
  %v806 = vsel %vm786, %v724, 0
  %v809 = vsel %vm786, %v725, 0
  %v812 = vsel %vm786, %v726, 0
  %v815 = vsel %vm786, %v727, 0
  %v818 = vsel %vm786, %v728, 0
  %v821 = vsel %vm786, %v729, 0
  %v824 = vsel %vm786, %v730, 0
  %v827 = vsel %vm786, %v731, 0
  %v830 = vsel %vm786, %v732, 0
  %v833 = vsel %vm786, %v733, 0
  %v836 = vsel %vm786, %v734, 0
  %v839 = vsel %vm786, %v735, 0
  %v842 = vsel %vm786, %v736, 0
  %v845 = vsel %vm786, %v737, 0
  %v848 = vsel %vm786, %v738, 0
  %v851 = vsel %vm786, %v739, 0
  %v854 = vsel %vm786, %v740, 0
  %v857 = vsel %vm786, %v741, 0
  %v860 = vsel %vm786, %v742, 0
  %v863 = vsel %vm786, %v743, 0
  %v866 = vsel %vm786, %v744, 0
  %v869 = vsel %vm786, %v745, 0
  %v872 = vsel %vm786, %v746, 0
  %v875 = vsel %vm786, %v747, 0
  %v878 = vsel %vm786, %v748, 0
  %v881 = vsel %vm786, %v749, 0
  %883 = vmatprep.subr.bf16.mxu0 0
  %884 = vmatpush1.bf16.msra.mxu0 0
  %885 = vmatprep.subr.bf16.mxu0 0
  %886 = vmatpush1.bf16.msra.mxu0 0
  %887 = vmatprep.subr.bf16.mxu0 0
  %888 = vmatpush1.bf16.msra.mxu0 0
  %889 = vmatprep.subr.bf16.mxu0 0
  %890 = vmatpush1.bf16.msra.mxu0 0
  %891 = vmatprep.subr.bf16.mxu0 0
  %892 = vmatpush1.bf16.msra.mxu0 %v781
  %893 = vmatprep.subr.bf16.mxu0 0
  %894 = vmatpush1.bf16.msra.mxu0 %v780
  %895 = vmatprep.subr.bf16.mxu0 0
  %896 = vmatpush1.bf16.msra.mxu0 %v779
  %897 = vmatprep.subr.bf16.mxu0 0
  %898 = vmatpush1.bf16.msra.mxu0 %v778
  %899 = vmatprep.subr.bf16.mxu0 0
  %900 = vmatpush2.bf16.msra.mxu0 0
  %901 = vmatprep.subr.bf16.mxu0 0
  %902 = vmatpush2.bf16.msra.mxu0 0
  %903 = vmatprep.subr.bf16.mxu0 0
  %904 = vmatpush2.bf16.msra.mxu0 0
  %905 = vmatprep.subr.bf16.mxu0 0
  %906 = vmatpush2.bf16.msra.mxu0 0
  %907 = vmatprep.subr.bf16.mxu0 0
  %908 = vmatpush2.bf16.msra.mxu0 0
  %909 = vmatprep.subr.bf16.mxu0 0
  %910 = vmatpush2.bf16.msra.mxu0 0
  %911 = vmatprep.subr.bf16.mxu0 0
  %912 = vmatpush2.bf16.msra.mxu0 0
  %913 = vmatprep.subr.bf16.mxu0 0
  %914 = vmatpush2.bf16.msra.mxu0 0
  %915 = vmatprep.mubr.bf16.mxu0 0
  %916 = vmatmul.mubr.bf16.gmra.mxu0 %v788
  %v917 = vpop.f32.mrf.mxu0
  %v918 = vadd.f32 %v761, %v917
  %v919 = vpop.f32.mrf.mxu0
  %v920 = vpop.f32.mrf.mxu0
  %v921 = vadd.f32 %v761, %v920
  %v922 = vpop.f32.mrf.mxu0
  %923 = vmatprep.mubr.bf16.mxu0 0
  %924 = vmatmul.mubr.bf16.gmra.mxu0 %v791
  %v925 = vpop.f32.mrf.mxu0
  %v926 = vadd.f32 %v761, %v925
  %v927 = vpop.f32.mrf.mxu0
  %v928 = vpop.f32.mrf.mxu0
  %v929 = vadd.f32 %v761, %v928
  %v930 = vpop.f32.mrf.mxu0
  %931 = vmatprep.mubr.bf16.mxu0 0
  %932 = vmatmul.mubr.bf16.gmra.mxu0 %v794
  %v933 = vpop.f32.mrf.mxu0
  %v934 = vadd.f32 %v761, %v933
  %v935 = vpop.f32.mrf.mxu0
  %v936 = vpop.f32.mrf.mxu0
  %v937 = vadd.f32 %v761, %v936
  %v938 = vpop.f32.mrf.mxu0
  %939 = vmatprep.mubr.bf16.mxu0 0
  %940 = vmatmul.mubr.bf16.gmra.mxu0 %v797
  %v941 = vpop.f32.mrf.mxu0
  %v942 = vadd.f32 %v761, %v941
  %v943 = vpop.f32.mrf.mxu0
  %v944 = vpop.f32.mrf.mxu0
  %v945 = vadd.f32 %v761, %v944
  %v946 = vpop.f32.mrf.mxu0
  %947 = vmatprep.mubr.bf16.mxu0 0
  %948 = vmatmul.mubr.bf16.gmra.mxu0 %v800
  %v949 = vpop.f32.mrf.mxu0
  %v950 = vadd.f32 %v761, %v949
  %v951 = vpop.f32.mrf.mxu0
  %v952 = vpop.f32.mrf.mxu0
  %v953 = vadd.f32 %v761, %v952
  %v954 = vpop.f32.mrf.mxu0
  %955 = vmatprep.mubr.bf16.mxu0 0
  %956 = vmatmul.mubr.bf16.gmra.mxu0 %v803
  %v957 = vpop.f32.mrf.mxu0
  %v958 = vadd.f32 %v761, %v957
  %v959 = vpop.f32.mrf.mxu0
  %v960 = vpop.f32.mrf.mxu0
  %v961 = vadd.f32 %v761, %v960
  %v962 = vpop.f32.mrf.mxu0
  %963 = vmatprep.mubr.bf16.mxu0 0
  %964 = vmatmul.mubr.bf16.gmra.mxu0 %v806
  %v965 = vpop.f32.mrf.mxu0
  %v966 = vadd.f32 %v761, %v965
  %v967 = vpop.f32.mrf.mxu0
  %v968 = vpop.f32.mrf.mxu0
  %v969 = vadd.f32 %v761, %v968
  %v970 = vpop.f32.mrf.mxu0
  %971 = vmatprep.mubr.bf16.mxu0 0
  %972 = vmatmul.mubr.bf16.gmra.mxu0 %v809
  %v973 = vpop.f32.mrf.mxu0
  %v974 = vadd.f32 %v761, %v973
  %v975 = vpop.f32.mrf.mxu0
  %v976 = vpop.f32.mrf.mxu0
  %v977 = vadd.f32 %v761, %v976
  %v978 = vpop.f32.mrf.mxu0
  %979 = vmatprep.mubr.bf16.mxu0 0
  %980 = vmatmul.mubr.bf16.gmra.mxu0 %v812
  %v981 = vpop.f32.mrf.mxu0
  %v982 = vadd.f32 %v761, %v981
  %v983 = vpop.f32.mrf.mxu0
  %v984 = vpop.f32.mrf.mxu0
  %v985 = vadd.f32 %v761, %v984
  %v986 = vpop.f32.mrf.mxu0
  %987 = vmatprep.mubr.bf16.mxu0 0
  %988 = vmatmul.mubr.bf16.gmra.mxu0 %v815
  %v989 = vpop.f32.mrf.mxu0
  %v990 = vadd.f32 %v761, %v989
  %v991 = vpop.f32.mrf.mxu0
  %v992 = vpop.f32.mrf.mxu0
  %v993 = vadd.f32 %v761, %v992
  %v994 = vpop.f32.mrf.mxu0
  %995 = vmatprep.mubr.bf16.mxu0 0
  %996 = vmatmul.mubr.bf16.gmra.mxu0 %v818
  %v997 = vpop.f32.mrf.mxu0
  %v998 = vadd.f32 %v761, %v997
  %v999 = vpop.f32.mrf.mxu0
  %v1000 = vpop.f32.mrf.mxu0
  %v1001 = vadd.f32 %v761, %v1000
  %v1002 = vpop.f32.mrf.mxu0
  %1003 = vmatprep.mubr.bf16.mxu0 0
  %1004 = vmatmul.mubr.bf16.gmra.mxu0 %v821
  %v1005 = vpop.f32.mrf.mxu0
  %v1006 = vadd.f32 %v761, %v1005
  %v1007 = vpop.f32.mrf.mxu0
  %v1008 = vpop.f32.mrf.mxu0
  %v1009 = vadd.f32 %v761, %v1008
  %v1010 = vpop.f32.mrf.mxu0
  %1011 = vmatprep.mubr.bf16.mxu0 0
  %1012 = vmatmul.mubr.bf16.gmra.mxu0 %v824
  %v1013 = vpop.f32.mrf.mxu0
  %v1014 = vadd.f32 %v761, %v1013
  %v1015 = vpop.f32.mrf.mxu0
  %v1016 = vpop.f32.mrf.mxu0
  %v1017 = vadd.f32 %v761, %v1016
  %v1018 = vpop.f32.mrf.mxu0
  %1019 = vmatprep.mubr.bf16.mxu0 0
  %1020 = vmatmul.mubr.bf16.gmra.mxu0 %v827
  %v1021 = vpop.f32.mrf.mxu0
  %v1022 = vadd.f32 %v761, %v1021
  %v1023 = vpop.f32.mrf.mxu0
  %v1024 = vpop.f32.mrf.mxu0
  %v1025 = vadd.f32 %v761, %v1024
  %v1026 = vpop.f32.mrf.mxu0
  %1027 = vmatprep.mubr.bf16.mxu0 0
  %1028 = vmatmul.mubr.bf16.gmra.mxu0 %v830
  %v1029 = vpop.f32.mrf.mxu0
  %v1030 = vadd.f32 %v761, %v1029
  %v1031 = vpop.f32.mrf.mxu0
  %v1032 = vpop.f32.mrf.mxu0
  %v1033 = vadd.f32 %v761, %v1032
  %v1034 = vpop.f32.mrf.mxu0
  %1035 = vmatprep.mubr.bf16.mxu0 0
  %1036 = vmatmul.mubr.bf16.gmra.mxu0 %v833
  %v1037 = vpop.f32.mrf.mxu0
  %v1038 = vadd.f32 %v761, %v1037
  %v1039 = vpop.f32.mrf.mxu0
  %v1040 = vpop.f32.mrf.mxu0
  %v1041 = vadd.f32 %v761, %v1040
  %v1042 = vpop.f32.mrf.mxu0
  %1043 = vmatprep.mubr.bf16.mxu0 0
  %1044 = vmatmul.mubr.bf16.gmra.mxu0 %v836
  %v1045 = vpop.f32.mrf.mxu0
  %v1046 = vadd.f32 %v761, %v1045
  %v1047 = vpop.f32.mrf.mxu0
  %v1048 = vpop.f32.mrf.mxu0
  %v1049 = vadd.f32 %v761, %v1048
  %v1050 = vpop.f32.mrf.mxu0
  %1051 = vmatprep.mubr.bf16.mxu0 0
  %1052 = vmatmul.mubr.bf16.gmra.mxu0 %v839
  %v1053 = vpop.f32.mrf.mxu0
  %v1054 = vadd.f32 %v761, %v1053
  %v1055 = vpop.f32.mrf.mxu0
  %v1056 = vpop.f32.mrf.mxu0
  %v1057 = vadd.f32 %v761, %v1056
  %v1058 = vpop.f32.mrf.mxu0
  %1059 = vmatprep.mubr.bf16.mxu0 0
  %1060 = vmatmul.mubr.bf16.gmra.mxu0 %v842
  %v1061 = vpop.f32.mrf.mxu0
  %v1062 = vadd.f32 %v761, %v1061
  %v1063 = vpop.f32.mrf.mxu0
  %v1064 = vpop.f32.mrf.mxu0
  %v1065 = vadd.f32 %v761, %v1064
  %v1066 = vpop.f32.mrf.mxu0
  %1067 = vmatprep.mubr.bf16.mxu0 0
  %1068 = vmatmul.mubr.bf16.gmra.mxu0 %v845
  %v1069 = vpop.f32.mrf.mxu0
  %v1070 = vadd.f32 %v761, %v1069
  %v1071 = vpop.f32.mrf.mxu0
  %v1072 = vpop.f32.mrf.mxu0
  %v1073 = vadd.f32 %v761, %v1072
  %v1074 = vpop.f32.mrf.mxu0
  %1075 = vmatprep.mubr.bf16.mxu0 0
  %1076 = vmatmul.mubr.bf16.gmra.mxu0 %v848
  %v1077 = vpop.f32.mrf.mxu0
  %v1078 = vadd.f32 %v761, %v1077
  %v1079 = vpop.f32.mrf.mxu0
  %v1080 = vpop.f32.mrf.mxu0
  %v1081 = vadd.f32 %v761, %v1080
  %v1082 = vpop.f32.mrf.mxu0
  %1083 = vmatprep.mubr.bf16.mxu0 0
  %1084 = vmatmul.mubr.bf16.gmra.mxu0 %v851
  %v1085 = vpop.f32.mrf.mxu0
  %v1086 = vadd.f32 %v761, %v1085
  %v1087 = vpop.f32.mrf.mxu0
  %v1088 = vpop.f32.mrf.mxu0
  %v1089 = vadd.f32 %v761, %v1088
  %v1090 = vpop.f32.mrf.mxu0
  %1091 = vmatprep.mubr.bf16.mxu0 0
  %1092 = vmatmul.mubr.bf16.gmra.mxu0 %v854
  %v1093 = vpop.f32.mrf.mxu0
  %v1094 = vadd.f32 %v761, %v1093
  %v1095 = vpop.f32.mrf.mxu0
  %v1096 = vpop.f32.mrf.mxu0
  %v1097 = vadd.f32 %v761, %v1096
  %v1098 = vpop.f32.mrf.mxu0
  %1099 = vmatprep.mubr.bf16.mxu0 0
  %1100 = vmatmul.mubr.bf16.gmra.mxu0 %v857
  %v1101 = vpop.f32.mrf.mxu0
  %v1102 = vadd.f32 %v761, %v1101
  %v1103 = vpop.f32.mrf.mxu0
  %v1104 = vpop.f32.mrf.mxu0
  %v1105 = vadd.f32 %v761, %v1104
  %v1106 = vpop.f32.mrf.mxu0
  %1107 = vmatprep.mubr.bf16.mxu0 0
  %1108 = vmatmul.mubr.bf16.gmra.mxu0 %v860
  %v1109 = vpop.f32.mrf.mxu0
  %v1110 = vadd.f32 %v761, %v1109
  %v1111 = vpop.f32.mrf.mxu0
  %v1112 = vpop.f32.mrf.mxu0
  %v1113 = vadd.f32 %v761, %v1112
  %v1114 = vpop.f32.mrf.mxu0
  %1115 = vmatprep.mubr.bf16.mxu0 0
  %1116 = vmatmul.mubr.bf16.gmra.mxu0 %v863
  %v1117 = vpop.f32.mrf.mxu0
  %v1118 = vadd.f32 %v761, %v1117
  %v1119 = vpop.f32.mrf.mxu0
  %v1120 = vpop.f32.mrf.mxu0
  %v1121 = vadd.f32 %v761, %v1120
  %v1122 = vpop.f32.mrf.mxu0
  %1123 = vmatprep.mubr.bf16.mxu0 0
  %1124 = vmatmul.mubr.bf16.gmra.mxu0 %v866
  %v1125 = vpop.f32.mrf.mxu0
  %v1126 = vadd.f32 %v761, %v1125
  %v1127 = vpop.f32.mrf.mxu0
  %v1128 = vpop.f32.mrf.mxu0
  %v1129 = vadd.f32 %v761, %v1128
  %v1130 = vpop.f32.mrf.mxu0
  %1131 = vmatprep.mubr.bf16.mxu0 0
  %1132 = vmatmul.mubr.bf16.gmra.mxu0 %v869
  %v1133 = vpop.f32.mrf.mxu0
  %v1134 = vadd.f32 %v761, %v1133
  %v1135 = vpop.f32.mrf.mxu0
  %v1136 = vpop.f32.mrf.mxu0
  %v1137 = vadd.f32 %v761, %v1136
  %v1138 = vpop.f32.mrf.mxu0
  %1139 = vmatprep.mubr.bf16.mxu0 0
  %1140 = vmatmul.mubr.bf16.gmra.mxu0 %v872
  %v1141 = vpop.f32.mrf.mxu0
  %v1142 = vadd.f32 %v761, %v1141
  %v1143 = vpop.f32.mrf.mxu0
  %v1144 = vpop.f32.mrf.mxu0
  %v1145 = vadd.f32 %v761, %v1144
  %v1146 = vpop.f32.mrf.mxu0
  %1147 = vmatprep.mubr.bf16.mxu0 0
  %1148 = vmatmul.mubr.bf16.gmra.mxu0 %v875
  %v1149 = vpop.f32.mrf.mxu0
  %v1150 = vadd.f32 %v761, %v1149
  %v1151 = vpop.f32.mrf.mxu0
  %v1152 = vpop.f32.mrf.mxu0
  %v1153 = vadd.f32 %v761, %v1152
  %v1154 = vpop.f32.mrf.mxu0
  %1155 = vmatprep.mubr.bf16.mxu0 0
  %1156 = vmatmul.mubr.bf16.gmra.mxu0 %v878
  %v1157 = vpop.f32.mrf.mxu0
  %v1158 = vadd.f32 %v761, %v1157
  %v1159 = vpop.f32.mrf.mxu0
  %v1160 = vpop.f32.mrf.mxu0
  %v1161 = vadd.f32 %v761, %v1160
  %v1162 = vpop.f32.mrf.mxu0
  %1163 = vmatprep.mubr.bf16.mxu0 0
  %1164 = vmatmul.mubr.bf16.gmra.mxu0 %v881
  %v1165 = vpop.f32.mrf.mxu0
  %v1166 = vadd.f32 %v761, %v1165
  %v1167 = vpop.f32.mrf.mxu0
  %v1168 = vpop.f32.mrf.mxu0
  %v1169 = vadd.f32 %v761, %v1168
  %v1170 = vpop.f32.mrf.mxu0
  %1171 = vdwg.mxu0
  %v1172 = vmax.f32 %v918, 0.0
  %v1173 = vmax.f32 %v921, 0.0
  %v1174 = vmax.f32 %v926, 0.0
  %v1175 = vmax.f32 %v929, 0.0
  %v1176 = vmax.f32 %v934, 0.0
  %v1177 = vmax.f32 %v937, 0.0
  %v1178 = vmax.f32 %v942, 0.0
  %v1179 = vmax.f32 %v945, 0.0
  %v1180 = vmax.f32 %v950, 0.0
  %v1181 = vmax.f32 %v953, 0.0
  %v1182 = vmax.f32 %v958, 0.0
  %v1183 = vmax.f32 %v961, 0.0
  %v1184 = vmax.f32 %v966, 0.0
  %v1185 = vmax.f32 %v969, 0.0
  %v1186 = vmax.f32 %v974, 0.0
  %v1187 = vmax.f32 %v977, 0.0
  %v1188 = vmax.f32 %v982, 0.0
  %v1189 = vmax.f32 %v985, 0.0
  %v1190 = vmax.f32 %v990, 0.0
  %v1191 = vmax.f32 %v993, 0.0
  %v1192 = vmax.f32 %v998, 0.0
  %v1193 = vmax.f32 %v1001, 0.0
  %v1194 = vmax.f32 %v1006, 0.0
  %v1195 = vmax.f32 %v1009, 0.0
  %v1196 = vmax.f32 %v1014, 0.0
  %v1197 = vmax.f32 %v1017, 0.0
  %v1198 = vmax.f32 %v1022, 0.0
  %v1199 = vmax.f32 %v1025, 0.0
  %v1200 = vmax.f32 %v1030, 0.0
  %v1201 = vmax.f32 %v1033, 0.0
  %v1202 = vmax.f32 %v1038, 0.0
  %v1203 = vmax.f32 %v1041, 0.0
  %v1204 = vmax.f32 %v1046, 0.0
  %v1205 = vmax.f32 %v1049, 0.0
  %v1206 = vmax.f32 %v1054, 0.0
  %v1207 = vmax.f32 %v1057, 0.0
  %v1208 = vmax.f32 %v1062, 0.0
  %v1209 = vmax.f32 %v1065, 0.0
  %v1210 = vmax.f32 %v1070, 0.0
  %v1211 = vmax.f32 %v1073, 0.0
  %v1212 = vmax.f32 %v1078, 0.0
  %v1213 = vmax.f32 %v1081, 0.0
  %v1214 = vmax.f32 %v1086, 0.0
  %v1215 = vmax.f32 %v1089, 0.0
  %v1216 = vmax.f32 %v1094, 0.0
  %v1217 = vmax.f32 %v1097, 0.0
  %v1218 = vmax.f32 %v1102, 0.0
  %v1219 = vmax.f32 %v1105, 0.0
  %v1220 = vmax.f32 %v1110, 0.0
  %v1221 = vmax.f32 %v1113, 0.0
  %v1222 = vmax.f32 %v1118, 0.0
  %v1223 = vmax.f32 %v1121, 0.0
  %v1224 = vmax.f32 %v1126, 0.0
  %v1225 = vmax.f32 %v1129, 0.0
  %v1226 = vmax.f32 %v1134, 0.0
  %v1227 = vmax.f32 %v1137, 0.0
  %v1228 = vmax.f32 %v1142, 0.0
  %v1229 = vmax.f32 %v1145, 0.0
  %v1230 = vmax.f32 %v1150, 0.0
  %v1231 = vmax.f32 %v1153, 0.0
  %v1232 = vmax.f32 %v1158, 0.0
  %v1233 = vmax.f32 %v1161, 0.0
  %v1234 = vmax.f32 %v1166, 0.0
  %v1235 = vmax.f32 %v1169, 0.0
  %v1236 = vpack.c.bf16 %v1173, %v1172
  %v1237 = vpack.c.bf16 %v1175, %v1174
  %v1238 = vpack.c.bf16 %v1177, %v1176
  %v1239 = vpack.c.bf16 %v1179, %v1178
  %v1240 = vpack.c.bf16 %v1181, %v1180
  %v1241 = vpack.c.bf16 %v1183, %v1182
  %v1242 = vpack.c.bf16 %v1185, %v1184
  %v1243 = vpack.c.bf16 %v1187, %v1186
  %v1244 = vpack.c.bf16 %v1189, %v1188
  %v1245 = vpack.c.bf16 %v1191, %v1190
  %v1246 = vpack.c.bf16 %v1193, %v1192
  %v1247 = vpack.c.bf16 %v1195, %v1194
  %v1248 = vpack.c.bf16 %v1197, %v1196
  %v1249 = vpack.c.bf16 %v1199, %v1198
  %v1250 = vpack.c.bf16 %v1201, %v1200
  %v1251 = vpack.c.bf16 %v1203, %v1202
  %v1252 = vpack.c.bf16 %v1205, %v1204
  %v1253 = vpack.c.bf16 %v1207, %v1206
  %v1254 = vpack.c.bf16 %v1209, %v1208
  %v1255 = vpack.c.bf16 %v1211, %v1210
  %v1256 = vpack.c.bf16 %v1213, %v1212
  %v1257 = vpack.c.bf16 %v1215, %v1214
  %v1258 = vpack.c.bf16 %v1217, %v1216
  %v1259 = vpack.c.bf16 %v1219, %v1218
  %v1260 = vpack.c.bf16 %v1221, %v1220
  %v1261 = vpack.c.bf16 %v1223, %v1222
  %v1262 = vpack.c.bf16 %v1225, %v1224
  %v1263 = vpack.c.bf16 %v1227, %v1226
  %v1264 = vpack.c.bf16 %v1229, %v1228
  %v1265 = vpack.c.bf16 %v1231, %v1230
  %v1266 = vpack.c.bf16 %v1233, %v1232
  %v1267 = vpack.c.bf16 %v1235, %v1234
  %v1268 = vld [vmem:[%s3] sm:$0xf]
  %v1269 = vld [vmem:[%s3 + $0x4] sm:$0xf]
  %v1270 = vld [vmem:[%s3 + $0x8] sm:$0xf]
  %v1271 = vld [vmem:[%s3 + $0xc] sm:$0xf]
  %v1272 = vlaneseq
  %v1273 = vshrl.u32 %v1272, 7
  %v1274 = vsub.s32 0, %v1273
  %v1275 = vrot.slane %v87, %v1274
  %v1280 = vunpack.c.l.b16 %v1268
  %v1281 = vunpack.c.l.b16 %v1269
  %v1282 = vunpack.c.l.b16 %v1270
  %v1283 = vunpack.c.l.b16 %v1271
  %v1284 = vpack.c.b16 %v1281, %v1280
  %v1285 = vpack.c.b16 %v1283, %v1282
  %v1289 = vsel %vm268, %v1236, 0
  %v1292 = vsel %vm268, %v1237, 0
  %v1295 = vsel %vm268, %v1238, 0
  %v1298 = vsel %vm268, %v1239, 0
  %v1301 = vsel %vm268, %v1240, 0
  %v1304 = vsel %vm268, %v1241, 0
  %v1307 = vsel %vm268, %v1242, 0
  %v1310 = vsel %vm268, %v1243, 0
  %v1313 = vsel %vm268, %v1244, 0
  %v1316 = vsel %vm268, %v1245, 0
  %v1319 = vsel %vm268, %v1246, 0
  %v1322 = vsel %vm268, %v1247, 0
  %v1325 = vsel %vm268, %v1248, 0
  %v1328 = vsel %vm268, %v1249, 0
  %v1331 = vsel %vm268, %v1250, 0
  %v1334 = vsel %vm268, %v1251, 0
  %v1337 = vsel %vm268, %v1252, 0
  %v1340 = vsel %vm268, %v1253, 0
  %v1343 = vsel %vm268, %v1254, 0
  %v1346 = vsel %vm268, %v1255, 0
  %v1349 = vsel %vm268, %v1256, 0
  %v1352 = vsel %vm268, %v1257, 0
  %v1355 = vsel %vm268, %v1258, 0
  %v1358 = vsel %vm268, %v1259, 0
  %v1361 = vsel %vm268, %v1260, 0
  %v1364 = vsel %vm268, %v1261, 0
  %v1367 = vsel %vm268, %v1262, 0
  %v1370 = vsel %vm268, %v1263, 0
  %v1373 = vsel %vm268, %v1264, 0
  %v1376 = vsel %vm268, %v1265, 0
  %v1379 = vsel %vm268, %v1266, 0
  %v1382 = vsel %vm268, %v1267, 0
  %1384 = vmatprep.subr.bf16.mxu0 0
  %1385 = vmatpush1.bf16.msra.mxu0 0
  %1386 = vmatprep.subr.bf16.mxu0 0
  %1387 = vmatpush1.bf16.msra.mxu0 0
  %1388 = vmatprep.subr.bf16.mxu0 0
  %1389 = vmatpush1.bf16.msra.mxu0 0
  %1390 = vmatprep.subr.bf16.mxu0 0
  %1391 = vmatpush1.bf16.msra.mxu0 0
  %1392 = vmatprep.subr.bf16.mxu0 0
  %1393 = vmatpush1.bf16.msra.mxu0 0
  %1394 = vmatprep.subr.bf16.mxu0 0
  %1395 = vmatpush1.bf16.msra.mxu0 0
  %1396 = vmatprep.subr.bf16.mxu0 0
  %1397 = vmatpush1.bf16.msra.mxu0 %v1285
  %1398 = vmatprep.subr.bf16.mxu0 0
  %1399 = vmatpush1.bf16.msra.mxu0 %v1284
  %1400 = vmatprep.subr.bf16.mxu0 0
  %1401 = vmatpush2.bf16.msra.mxu0 0
  %1402 = vmatprep.subr.bf16.mxu0 0
  %1403 = vmatpush2.bf16.msra.mxu0 0
  %1404 = vmatprep.subr.bf16.mxu0 0
  %1405 = vmatpush2.bf16.msra.mxu0 0
  %1406 = vmatprep.subr.bf16.mxu0 0
  %1407 = vmatpush2.bf16.msra.mxu0 0
  %1408 = vmatprep.subr.bf16.mxu0 0
  %1409 = vmatpush2.bf16.msra.mxu0 0
  %1410 = vmatprep.subr.bf16.mxu0 0
  %1411 = vmatpush2.bf16.msra.mxu0 0
  %1412 = vmatprep.subr.bf16.mxu0 0
  %1413 = vmatpush2.bf16.msra.mxu0 0
  %1414 = vmatprep.subr.bf16.mxu0 0
  %1415 = vmatpush2.bf16.msra.mxu0 0
  %1416 = vmatprep.mubr.bf16.mxu0 0
  %1417 = vmatmul.mubr.bf16.gmra.mxu0 %v1289
  %v1418 = vpop.f32.mrf.mxu0
  %v1419 = vadd.f32 %v1275, %v1418
  %v1420 = vpop.f32.mrf.mxu0
  %v1421 = vpop.f32.mrf.mxu0
  %v1422 = vadd.f32 %v1275, %v1421
  %v1423 = vpop.f32.mrf.mxu0
  %1424 = vmatprep.mubr.bf16.mxu0 0
  %1425 = vmatmul.mubr.bf16.gmra.mxu0 %v1292
  %v1426 = vpop.f32.mrf.mxu0
  %v1427 = vadd.f32 %v1275, %v1426
  %v1428 = vpop.f32.mrf.mxu0
  %v1429 = vpop.f32.mrf.mxu0
  %v1430 = vadd.f32 %v1275, %v1429
  %v1431 = vpop.f32.mrf.mxu0
  %1432 = vmatprep.mubr.bf16.mxu0 0
  %1433 = vmatmul.mubr.bf16.gmra.mxu0 %v1295
  %v1434 = vpop.f32.mrf.mxu0
  %v1435 = vadd.f32 %v1275, %v1434
  %v1436 = vpop.f32.mrf.mxu0
  %v1437 = vpop.f32.mrf.mxu0
  %v1438 = vadd.f32 %v1275, %v1437
  %v1439 = vpop.f32.mrf.mxu0
  %1440 = vmatprep.mubr.bf16.mxu0 0
  %1441 = vmatmul.mubr.bf16.gmra.mxu0 %v1298
  %v1442 = vpop.f32.mrf.mxu0
  %v1443 = vadd.f32 %v1275, %v1442
  %v1444 = vpop.f32.mrf.mxu0
  %v1445 = vpop.f32.mrf.mxu0
  %v1446 = vadd.f32 %v1275, %v1445
  %v1447 = vpop.f32.mrf.mxu0
  %1448 = vmatprep.mubr.bf16.mxu0 0
  %1449 = vmatmul.mubr.bf16.gmra.mxu0 %v1301
  %v1450 = vpop.f32.mrf.mxu0
  %v1451 = vadd.f32 %v1275, %v1450
  %v1452 = vpop.f32.mrf.mxu0
  %v1453 = vpop.f32.mrf.mxu0
  %v1454 = vadd.f32 %v1275, %v1453
  %v1455 = vpop.f32.mrf.mxu0
  %1456 = vmatprep.mubr.bf16.mxu0 0
  %1457 = vmatmul.mubr.bf16.gmra.mxu0 %v1304
  %v1458 = vpop.f32.mrf.mxu0
  %v1459 = vadd.f32 %v1275, %v1458
  %v1460 = vpop.f32.mrf.mxu0
  %v1461 = vpop.f32.mrf.mxu0
  %v1462 = vadd.f32 %v1275, %v1461
  %v1463 = vpop.f32.mrf.mxu0
  %1464 = vmatprep.mubr.bf16.mxu0 0
  %1465 = vmatmul.mubr.bf16.gmra.mxu0 %v1307
  %v1466 = vpop.f32.mrf.mxu0
  %v1467 = vadd.f32 %v1275, %v1466
  %v1468 = vpop.f32.mrf.mxu0
  %v1469 = vpop.f32.mrf.mxu0
  %v1470 = vadd.f32 %v1275, %v1469
  %v1471 = vpop.f32.mrf.mxu0
  %1472 = vmatprep.mubr.bf16.mxu0 0
  %1473 = vmatmul.mubr.bf16.gmra.mxu0 %v1310
  %v1474 = vpop.f32.mrf.mxu0
  %v1475 = vadd.f32 %v1275, %v1474
  %v1476 = vpop.f32.mrf.mxu0
  %v1477 = vpop.f32.mrf.mxu0
  %v1478 = vadd.f32 %v1275, %v1477
  %v1479 = vpop.f32.mrf.mxu0
  %1480 = vmatprep.mubr.bf16.mxu0 0
  %1481 = vmatmul.mubr.bf16.gmra.mxu0 %v1313
  %v1482 = vpop.f32.mrf.mxu0
  %v1483 = vadd.f32 %v1275, %v1482
  %v1484 = vpop.f32.mrf.mxu0
  %v1485 = vpop.f32.mrf.mxu0
  %v1486 = vadd.f32 %v1275, %v1485
  %v1487 = vpop.f32.mrf.mxu0
  %1488 = vmatprep.mubr.bf16.mxu0 0
  %1489 = vmatmul.mubr.bf16.gmra.mxu0 %v1316
  %v1490 = vpop.f32.mrf.mxu0
  %v1491 = vadd.f32 %v1275, %v1490
  %v1492 = vpop.f32.mrf.mxu0
  %v1493 = vpop.f32.mrf.mxu0
  %v1494 = vadd.f32 %v1275, %v1493
  %v1495 = vpop.f32.mrf.mxu0
  %1496 = vmatprep.mubr.bf16.mxu0 0
  %1497 = vmatmul.mubr.bf16.gmra.mxu0 %v1319
  %v1498 = vpop.f32.mrf.mxu0
  %v1499 = vadd.f32 %v1275, %v1498
  %v1500 = vpop.f32.mrf.mxu0
  %v1501 = vpop.f32.mrf.mxu0
  %v1502 = vadd.f32 %v1275, %v1501
  %v1503 = vpop.f32.mrf.mxu0
  %1504 = vmatprep.mubr.bf16.mxu0 0
  %1505 = vmatmul.mubr.bf16.gmra.mxu0 %v1322
  %v1506 = vpop.f32.mrf.mxu0
  %v1507 = vadd.f32 %v1275, %v1506
  %v1508 = vpop.f32.mrf.mxu0
  %v1509 = vpop.f32.mrf.mxu0
  %v1510 = vadd.f32 %v1275, %v1509
  %v1511 = vpop.f32.mrf.mxu0
  %1512 = vmatprep.mubr.bf16.mxu0 0
  %1513 = vmatmul.mubr.bf16.gmra.mxu0 %v1325
  %v1514 = vpop.f32.mrf.mxu0
  %v1515 = vadd.f32 %v1275, %v1514
  %v1516 = vpop.f32.mrf.mxu0
  %v1517 = vpop.f32.mrf.mxu0
  %v1518 = vadd.f32 %v1275, %v1517
  %v1519 = vpop.f32.mrf.mxu0
  %1520 = vmatprep.mubr.bf16.mxu0 0
  %1521 = vmatmul.mubr.bf16.gmra.mxu0 %v1328
  %v1522 = vpop.f32.mrf.mxu0
  %v1523 = vadd.f32 %v1275, %v1522
  %v1524 = vpop.f32.mrf.mxu0
  %v1525 = vpop.f32.mrf.mxu0
  %v1526 = vadd.f32 %v1275, %v1525
  %v1527 = vpop.f32.mrf.mxu0
  %1528 = vmatprep.mubr.bf16.mxu0 0
  %1529 = vmatmul.mubr.bf16.gmra.mxu0 %v1331
  %v1530 = vpop.f32.mrf.mxu0
  %v1531 = vadd.f32 %v1275, %v1530
  %v1532 = vpop.f32.mrf.mxu0
  %v1533 = vpop.f32.mrf.mxu0
  %v1534 = vadd.f32 %v1275, %v1533
  %v1535 = vpop.f32.mrf.mxu0
  %1536 = vmatprep.mubr.bf16.mxu0 0
  %1537 = vmatmul.mubr.bf16.gmra.mxu0 %v1334
  %v1538 = vpop.f32.mrf.mxu0
  %v1539 = vadd.f32 %v1275, %v1538
  %v1540 = vpop.f32.mrf.mxu0
  %v1541 = vpop.f32.mrf.mxu0
  %v1542 = vadd.f32 %v1275, %v1541
  %v1543 = vpop.f32.mrf.mxu0
  %1544 = vmatprep.mubr.bf16.mxu0 0
  %1545 = vmatmul.mubr.bf16.gmra.mxu0 %v1337
  %v1546 = vpop.f32.mrf.mxu0
  %v1547 = vadd.f32 %v1275, %v1546
  %v1548 = vpop.f32.mrf.mxu0
  %v1549 = vpop.f32.mrf.mxu0
  %v1550 = vadd.f32 %v1275, %v1549
  %v1551 = vpop.f32.mrf.mxu0
  %1552 = vmatprep.mubr.bf16.mxu0 0
  %1553 = vmatmul.mubr.bf16.gmra.mxu0 %v1340
  %v1554 = vpop.f32.mrf.mxu0
  %v1555 = vadd.f32 %v1275, %v1554
  %v1556 = vpop.f32.mrf.mxu0
  %v1557 = vpop.f32.mrf.mxu0
  %v1558 = vadd.f32 %v1275, %v1557
  %v1559 = vpop.f32.mrf.mxu0
  %1560 = vmatprep.mubr.bf16.mxu0 0
  %1561 = vmatmul.mubr.bf16.gmra.mxu0 %v1343
  %v1562 = vpop.f32.mrf.mxu0
  %v1563 = vadd.f32 %v1275, %v1562
  %v1564 = vpop.f32.mrf.mxu0
  %v1565 = vpop.f32.mrf.mxu0
  %v1566 = vadd.f32 %v1275, %v1565
  %v1567 = vpop.f32.mrf.mxu0
  %1568 = vmatprep.mubr.bf16.mxu0 0
  %1569 = vmatmul.mubr.bf16.gmra.mxu0 %v1346
  %v1570 = vpop.f32.mrf.mxu0
  %v1571 = vadd.f32 %v1275, %v1570
  %v1572 = vpop.f32.mrf.mxu0
  %v1573 = vpop.f32.mrf.mxu0
  %v1574 = vadd.f32 %v1275, %v1573
  %v1575 = vpop.f32.mrf.mxu0
  %1576 = vmatprep.mubr.bf16.mxu0 0
  %1577 = vmatmul.mubr.bf16.gmra.mxu0 %v1349
  %v1578 = vpop.f32.mrf.mxu0
  %v1579 = vadd.f32 %v1275, %v1578
  %v1580 = vpop.f32.mrf.mxu0
  %v1581 = vpop.f32.mrf.mxu0
  %v1582 = vadd.f32 %v1275, %v1581
  %v1583 = vpop.f32.mrf.mxu0
  %1584 = vmatprep.mubr.bf16.mxu0 0
  %1585 = vmatmul.mubr.bf16.gmra.mxu0 %v1352
  %v1586 = vpop.f32.mrf.mxu0
  %v1587 = vadd.f32 %v1275, %v1586
  %v1588 = vpop.f32.mrf.mxu0
  %v1589 = vpop.f32.mrf.mxu0
  %v1590 = vadd.f32 %v1275, %v1589
  %v1591 = vpop.f32.mrf.mxu0
  %1592 = vmatprep.mubr.bf16.mxu0 0
  %1593 = vmatmul.mubr.bf16.gmra.mxu0 %v1355
  %v1594 = vpop.f32.mrf.mxu0
  %v1595 = vadd.f32 %v1275, %v1594
  %v1596 = vpop.f32.mrf.mxu0
  %v1597 = vpop.f32.mrf.mxu0
  %v1598 = vadd.f32 %v1275, %v1597
  %v1599 = vpop.f32.mrf.mxu0
  %1600 = vmatprep.mubr.bf16.mxu0 0
  %1601 = vmatmul.mubr.bf16.gmra.mxu0 %v1358
  %v1602 = vpop.f32.mrf.mxu0
  %v1603 = vadd.f32 %v1275, %v1602
  %v1604 = vpop.f32.mrf.mxu0
  %v1605 = vpop.f32.mrf.mxu0
  %v1606 = vadd.f32 %v1275, %v1605
  %v1607 = vpop.f32.mrf.mxu0
  %1608 = vmatprep.mubr.bf16.mxu0 0
  %1609 = vmatmul.mubr.bf16.gmra.mxu0 %v1361
  %v1610 = vpop.f32.mrf.mxu0
  %v1611 = vadd.f32 %v1275, %v1610
  %v1612 = vpop.f32.mrf.mxu0
  %v1613 = vpop.f32.mrf.mxu0
  %v1614 = vadd.f32 %v1275, %v1613
  %v1615 = vpop.f32.mrf.mxu0
  %1616 = vmatprep.mubr.bf16.mxu0 0
  %1617 = vmatmul.mubr.bf16.gmra.mxu0 %v1364
  %v1618 = vpop.f32.mrf.mxu0
  %v1619 = vadd.f32 %v1275, %v1618
  %v1620 = vpop.f32.mrf.mxu0
  %v1621 = vpop.f32.mrf.mxu0
  %v1622 = vadd.f32 %v1275, %v1621
  %v1623 = vpop.f32.mrf.mxu0
  %1624 = vmatprep.mubr.bf16.mxu0 0
  %1625 = vmatmul.mubr.bf16.gmra.mxu0 %v1367
  %v1626 = vpop.f32.mrf.mxu0
  %v1627 = vadd.f32 %v1275, %v1626
  %v1628 = vpop.f32.mrf.mxu0
  %v1629 = vpop.f32.mrf.mxu0
  %v1630 = vadd.f32 %v1275, %v1629
  %v1631 = vpop.f32.mrf.mxu0
  %1632 = vmatprep.mubr.bf16.mxu0 0
  %1633 = vmatmul.mubr.bf16.gmra.mxu0 %v1370
  %v1634 = vpop.f32.mrf.mxu0
  %v1635 = vadd.f32 %v1275, %v1634
  %v1636 = vpop.f32.mrf.mxu0
  %v1637 = vpop.f32.mrf.mxu0
  %v1638 = vadd.f32 %v1275, %v1637
  %v1639 = vpop.f32.mrf.mxu0
  %1640 = vmatprep.mubr.bf16.mxu0 0
  %1641 = vmatmul.mubr.bf16.gmra.mxu0 %v1373
  %v1642 = vpop.f32.mrf.mxu0
  %v1643 = vadd.f32 %v1275, %v1642
  %v1644 = vpop.f32.mrf.mxu0
  %v1645 = vpop.f32.mrf.mxu0
  %v1646 = vadd.f32 %v1275, %v1645
  %v1647 = vpop.f32.mrf.mxu0
  %1648 = vmatprep.mubr.bf16.mxu0 0
  %1649 = vmatmul.mubr.bf16.gmra.mxu0 %v1376
  %v1650 = vpop.f32.mrf.mxu0
  %v1651 = vadd.f32 %v1275, %v1650
  %v1652 = vpop.f32.mrf.mxu0
  %v1653 = vpop.f32.mrf.mxu0
  %v1654 = vadd.f32 %v1275, %v1653
  %v1655 = vpop.f32.mrf.mxu0
  %1656 = vmatprep.mubr.bf16.mxu0 0
  %1657 = vmatmul.mubr.bf16.gmra.mxu0 %v1379
  %v1658 = vpop.f32.mrf.mxu0
  %v1659 = vadd.f32 %v1275, %v1658
  %v1660 = vpop.f32.mrf.mxu0
  %v1661 = vpop.f32.mrf.mxu0
  %v1662 = vadd.f32 %v1275, %v1661
  %v1663 = vpop.f32.mrf.mxu0
  %1664 = vmatprep.mubr.bf16.mxu0 0
  %1665 = vmatmul.mubr.bf16.gmra.mxu0 %v1382
  %v1666 = vpop.f32.mrf.mxu0
  %v1667 = vadd.f32 %v1275, %v1666
  %v1668 = vpop.f32.mrf.mxu0
  %v1669 = vpop.f32.mrf.mxu0
  %v1670 = vadd.f32 %v1275, %v1669
  %v1671 = vpop.f32.mrf.mxu0
  %1672 = vdwg.mxu0
  %1673 = vst [vmem:[%s5] sm:$0xff] %v1419
  %1674 = vst [vmem:[%s5 + $0x8] sm:$0xff] %v1422
  %1675 = vst [vmem:[%s5 + $0x10] sm:$0xff] %v1427
  %1676 = vst [vmem:[%s5 + $0x18] sm:$0xff] %v1430
  %1677 = vst [vmem:[%s5 + $0x20] sm:$0xff] %v1435
  %1678 = vst [vmem:[%s5 + $0x28] sm:$0xff] %v1438
  %1679 = vst [vmem:[%s5 + $0x30] sm:$0xff] %v1443
  %1680 = vst [vmem:[%s5 + $0x38] sm:$0xff] %v1446
  %1681 = vst [vmem:[%s5 + $0x40] sm:$0xff] %v1451
  %1682 = vst [vmem:[%s5 + $0x48] sm:$0xff] %v1454
  %1683 = vst [vmem:[%s5 + $0x50] sm:$0xff] %v1459
  %1684 = vst [vmem:[%s5 + $0x58] sm:$0xff] %v1462
  %1685 = vst [vmem:[%s5 + $0x60] sm:$0xff] %v1467
  %1686 = vst [vmem:[%s5 + $0x68] sm:$0xff] %v1470
  %1687 = vst [vmem:[%s5 + $0x70] sm:$0xff] %v1475
  %1688 = vst [vmem:[%s5 + $0x78] sm:$0xff] %v1478
  %1689 = vst [vmem:[%s5 + $0x80] sm:$0xff] %v1483
  %1690 = vst [vmem:[%s5 + $0x88] sm:$0xff] %v1486
  %1691 = vst [vmem:[%s5 + $0x90] sm:$0xff] %v1491
  %1692 = vst [vmem:[%s5 + $0x98] sm:$0xff] %v1494
  %1693 = vst [vmem:[%s5 + $0xa0] sm:$0xff] %v1499
  %1694 = vst [vmem:[%s5 + $0xa8] sm:$0xff] %v1502
  %1695 = vst [vmem:[%s5 + $0xb0] sm:$0xff] %v1507
  %1696 = vst [vmem:[%s5 + $0xb8] sm:$0xff] %v1510
  %1697 = vst [vmem:[%s5 + $0xc0] sm:$0xff] %v1515
  %1698 = vst [vmem:[%s5 + $0xc8] sm:$0xff] %v1518
  %1699 = vst [vmem:[%s5 + $0xd0] sm:$0xff] %v1523
  %1700 = vst [vmem:[%s5 + $0xd8] sm:$0xff] %v1526
  %1701 = vst [vmem:[%s5 + $0xe0] sm:$0xff] %v1531
  %1702 = vst [vmem:[%s5 + $0xe8] sm:$0xff] %v1534
  %1703 = vst [vmem:[%s5 + $0xf0] sm:$0xff] %v1539
  %1704 = vst [vmem:[%s5 + $0xf8] sm:$0xff] %v1542
  %1705 = vst [vmem:[%s5 + $0x100] sm:$0xff] %v1547
  %1706 = vst [vmem:[%s5 + $0x108] sm:$0xff] %v1550
  %1707 = vst [vmem:[%s5 + $0x110] sm:$0xff] %v1555
  %1708 = vst [vmem:[%s5 + $0x118] sm:$0xff] %v1558
  %1709 = vst [vmem:[%s5 + $0x120] sm:$0xff] %v1563
  %1710 = vst [vmem:[%s5 + $0x128] sm:$0xff] %v1566
  %1711 = vst [vmem:[%s5 + $0x130] sm:$0xff] %v1571
  %1712 = vst [vmem:[%s5 + $0x138] sm:$0xff] %v1574
  %1713 = vst [vmem:[%s5 + $0x140] sm:$0xff] %v1579
  %1714 = vst [vmem:[%s5 + $0x148] sm:$0xff] %v1582
  %1715 = vst [vmem:[%s5 + $0x150] sm:$0xff] %v1587
  %1716 = vst [vmem:[%s5 + $0x158] sm:$0xff] %v1590
  %1717 = vst [vmem:[%s5 + $0x160] sm:$0xff] %v1595
  %1718 = vst [vmem:[%s5 + $0x168] sm:$0xff] %v1598
  %1719 = vst [vmem:[%s5 + $0x170] sm:$0xff] %v1603
  %1720 = vst [vmem:[%s5 + $0x178] sm:$0xff] %v1606
  %1721 = vst [vmem:[%s5 + $0x180] sm:$0xff] %v1611
  %1722 = vst [vmem:[%s5 + $0x188] sm:$0xff] %v1614
  %1723 = vst [vmem:[%s5 + $0x190] sm:$0xff] %v1619
  %1724 = vst [vmem:[%s5 + $0x198] sm:$0xff] %v1622
  %1725 = vst [vmem:[%s5 + $0x1a0] sm:$0xff] %v1627
  %1726 = vst [vmem:[%s5 + $0x1a8] sm:$0xff] %v1630
  %1727 = vst [vmem:[%s5 + $0x1b0] sm:$0xff] %v1635
  %1728 = vst [vmem:[%s5 + $0x1b8] sm:$0xff] %v1638
  %1729 = vst [vmem:[%s5 + $0x1c0] sm:$0xff] %v1643
  %1730 = vst [vmem:[%s5 + $0x1c8] sm:$0xff] %v1646
  %1731 = vst [vmem:[%s5 + $0x1d0] sm:$0xff] %v1651
  %1732 = vst [vmem:[%s5 + $0x1d8] sm:$0xff] %v1654
  %1733 = vst [vmem:[%s5 + $0x1e0] sm:$0xff] %v1659
  %1734 = vst [vmem:[%s5 + $0x1e8] sm:$0xff] %v1662
  %1735 = vst [vmem:[%s5 + $0x1f0] sm:$0xff] %v1667
  %1736 = vst [vmem:[%s5 + $0x1f8] sm:$0xff] %v1670
  // Predicated region
  $region22: #{nest_mlp.1} parent=0 // pred_check
    _
  $region23: #{nest_mlp.1} parent=0 // pred_check_branch
    %1738 = sbr.rel (0) target = $region25
  $region24: #{nest_mlp.1} parent=0 // pred_region
    _
  $region25: #{nest_mlp.1} parent=0 // pred_fallthru
    _
  // Predicated region
  $region26: #{nest_mlp.1} parent=0 // pred_check
    _
  $region27: #{nest_mlp.1} parent=0 // pred_check_branch
    %1740 = sbr.rel (0) target = $region29
  $region28: #{nest_mlp.1} parent=0 // pred_region
    _
  $region29: #{nest_mlp.1} parent=0 // pred_fallthru
    _

</llo_original>
